<compile_context>
chip_gen: v7x
topology: tpu7x:2x2x1
jax: 0.10.0
libtpu: 0.0.40
codegen_flags: <defaults>
</compile_context>

<pallas_src>
import functools

import jax
import jax.numpy as jnp
import numpy as np
from jax.experimental import pallas as pl
from jax.experimental.pallas import tpu as pltpu


def _concat_conv2d_kernel(x_ref, w_ref, b_ref, o_ref, *, kh_size, kw_size):
    # x_ref : (1, H, W, Cin)       NHWC image for one batch element
    # w_ref : (KH*KW*Cin, Cout)    filters flattened tap-major ((kh, kw, c))
    # b_ref : (Cout, 1)            effective bias (time channel folded in)
    # o_ref : (1, Cout, Ho*Wo)     NCHW output with spatial dims flattened (lane-dense)
    _, H, W, Cin = x_ref.shape
    Ho = H - kh_size + 1
    Wo = W - kw_size + 1

    img = x_ref[0]                                            # (H, W, Cin), single load

    # im2col: build one (Ho*Wo, KH*KW*Cin) patch matrix.  Taps are fused along
    # the lane axis; output rows are stacked along the sublane axis.
    row_patches = []
    for h in range(Ho):                                       # static unroll
        taps = []
        for kh in range(kh_size):
            for kw in range(kw_size):
                taps.append(img[h + kh, kw:kw + Wo, :])       # (Wo, Cin)
            # kw shifts above are value slices of the same loaded row h+kh.
        row_patches.append(jnp.concatenate(taps, axis=-1))    # (Wo, KH*KW*Cin)
    patches = jnp.concatenate(row_patches, axis=0)            # (Ho*Wo, KH*KW*Cin)

    # Single MXU contraction per batch element (default precision, f32 accum).
    acc = jnp.dot(patches, w_ref[...], preferred_element_type=jnp.float32)  # (Ho*Wo, Cout)

    # Transposed result -> (Cout, Ho*Wo): the output block is lane-dense
    # (196 lanes) and already NCHW-ordered, so no wrapper transpose is needed.
    o_ref[0] = (acc.T + b_ref[...]).astype(o_ref.dtype)


def concat_conv2d(t, x, weight, bias):
    """ConcatConv2d.forward(t, x).

    t:      scalar
    x:      (N, Cin, H, W)   float32, NCHW (PyTorch convention)
    weight: (Cout, Cin+1, KH, KW)  PyTorch OIHW (channel 0 is the time channel)
    bias:   (Cout,)
    returns (N, Cout, Ho, Wo) NCHW with Ho=H-KH+1, Wo=W-KW+1 (padding=0, stride=1)
    """
    N, Cin, H, W = x.shape
    Cout, Cin1, KH, KW = weight.shape
    assert Cin1 == Cin + 1
    Ho, Wo = H - KH + 1, W - KW + 1

    # Fold the constant time channel into the bias.  Exact only because
    # padding=0 and the tt channel is spatially constant.
    bias_eff = bias + t * jnp.sum(weight[:, 0, :, :], axis=(1, 2))          # (Cout,)

    # Real-channel filters, flattened tap-major to match the kernel's patch order.
    w_mat = jnp.transpose(weight[:, 1:, :, :], (2, 3, 1, 0)).reshape(KH * KW * Cin, Cout)

    x_nhwc = jnp.transpose(x, (0, 2, 3, 1))                                 # (N, H, W, Cin)
    b_col = bias_eff.reshape(Cout, 1)

    kernel = functools.partial(_concat_conv2d_kernel, kh_size=KH, kw_size=KW)

    out_flat = pl.pallas_call(
        kernel,
        out_shape=jax.ShapeDtypeStruct((N, Cout, Ho * Wo), x.dtype),
        grid_spec=pltpu.PrefetchScalarGridSpec(
            num_scalar_prefetch=0,
            grid=(N,),                                   # one grid step per batch element
            in_specs=[
                pl.BlockSpec((1, H, W, Cin), lambda n: (n, 0, 0, 0)),
                pl.BlockSpec((KH * KW * Cin, Cout), lambda n: (0, 0)),
                pl.BlockSpec((Cout, 1), lambda n: (0, 0)),
            ],
            out_specs=pl.BlockSpec((1, Cout, Ho * Wo), lambda n: (n, 0, 0)),
        ),
        compiler_params=pltpu.CompilerParams(
            dimension_semantics=("parallel",),           # v7x: 2 TCs split the batch axis
        ),
    )(x_nhwc, w_mat, b_col)

    # Trailing-dim split only — no post-kernel transpose / extra HBM pass.
    return out_flat.reshape(N, Cout, Ho, Wo)


def init_params(key, dim_in, dim_out, ksize):
    """Deterministic PyTorch-style Conv2d init (kaiming_uniform-equivalent bounds)."""
    kw_key, kb_key = jax.random.split(key)
    cin1 = dim_in + 1
    fan_in = cin1 * ksize * ksize
    bound = 1.0 / np.sqrt(fan_in)
    weight = jax.random.uniform(
        kw_key, (dim_out, cin1, ksize, ksize), jnp.float32, -bound, bound)
    bias = jax.random.uniform(kb_key, (dim_out,), jnp.float32, -bound, bound)
    return weight, bias


def _reference(t, x, weight, bias):
    N, Cin, H, W = x.shape
    tt = jnp.full((N, 1, H, W), t, dtype=x.dtype)
    ttx = jnp.concatenate([tt, x], axis=1)
    out = jax.lax.conv_general_dilated(
        ttx, weight, window_strides=(1, 1), padding="VALID",
        dimension_numbers=("NCHW", "OIHW", "NCHW"))
    return out + bias[None, :, None, None]


if __name__ == "__main__":
    N, Cin, H, W = 2, 4, 16, 16
    Cout, ksize = 8, 3

    key = jax.random.PRNGKey(0)
    kx, kp = jax.random.split(key)
    x = jax.random.normal(kx, (N, Cin, H, W), jnp.float32)
    t = jnp.float32(0.5)
    weight, bias = init_params(kp, Cin, Cout, ksize)

    fwd = jax.jit(concat_conv2d)
    out = jax.block_until_ready(fwd(t, x, weight, bias))
    ref = jax.block_until_ready(_reference(t, x, weight, bias))

    assert out.shape == (N, Cout, H - ksize + 1, W - ksize + 1), out.shape
    # Tolerance loosened vs. the old HIGHEST-precision kernel: both sides now
    # use default (single-pass) MXU precision with f32 accumulation.
    np.testing.assert_allclose(np.asarray(out), np.asarray(ref), atol=2e-2, rtol=2e-2)

    print("KERNEL_OK")
</pallas_src>

<mosaic_0001>
module attributes {stable_mosaic.version = 11 : i64} {
  func.func @_concat_conv2d_kernel(%arg0: i32, %arg1: memref<1x16x16x4xf32, #tpu.memory_space<vmem>>, %arg2: memref<36x8xf32, #tpu.memory_space<vmem>>, %arg3: memref<8x1xf32, #tpu.memory_space<vmem>>, %arg4: memref<1x8x196xf32, #tpu.memory_space<vmem>>) attributes {dimension_semantics = [#tpu.dimension_semantics<parallel>], iteration_bounds = array<i64: 2>, scalar_prefetch = 0 : i64, scratch_operands = 0 : i64, tpu.core_type = #tpu.core_type<tc>, window_params = [{transform_indices = @transform_0, window_bounds = array<i64: 1, 16, 16, 4>}, {pipeline_mode = #tpu.pipeline_mode<synchronous>, transform_indices = @transform_1, window_bounds = array<i64: 36, 8>}, {pipeline_mode = #tpu.pipeline_mode<synchronous>, transform_indices = @transform_2, window_bounds = array<i64: 8, 1>}, {transform_indices = @transform_3, window_bounds = array<i64: 1, 8, 196>}]} {
    %c0 = arith.constant 0 : index
    %c0_0 = arith.constant 0 : index
    %c0_1 = arith.constant 0 : index
    %c0_2 = arith.constant 0 : index
    %0 = vector.load %arg1[%c0, %c0_0, %c0_1, %c0_2] : memref<1x16x16x4xf32, #tpu.memory_space<vmem>>, vector<1x16x16x4xf32>
    %1 = vector.shape_cast %0 : vector<1x16x16x4xf32> to vector<16x16x4xf32>
    %2 = vector.extract_strided_slice %1 {offsets = [0, 0, 0], sizes = [1, 14, 4], strides = [1, 1, 1]} : vector<16x16x4xf32> to vector<1x14x4xf32>
    %3 = vector.shape_cast %2 : vector<1x14x4xf32> to vector<14x4xf32>
    %4 = vector.extract_strided_slice %1 {offsets = [0, 1, 0], sizes = [1, 14, 4], strides = [1, 1, 1]} : vector<16x16x4xf32> to vector<1x14x4xf32>
    %5 = vector.shape_cast %4 : vector<1x14x4xf32> to vector<14x4xf32>
    %6 = vector.extract_strided_slice %1 {offsets = [0, 2, 0], sizes = [1, 14, 4], strides = [1, 1, 1]} : vector<16x16x4xf32> to vector<1x14x4xf32>
    %7 = vector.shape_cast %6 : vector<1x14x4xf32> to vector<14x4xf32>
    %8 = vector.extract_strided_slice %1 {offsets = [1, 0, 0], sizes = [1, 14, 4], strides = [1, 1, 1]} : vector<16x16x4xf32> to vector<1x14x4xf32>
    %9 = vector.shape_cast %8 : vector<1x14x4xf32> to vector<14x4xf32>
    %10 = vector.extract_strided_slice %1 {offsets = [1, 1, 0], sizes = [1, 14, 4], strides = [1, 1, 1]} : vector<16x16x4xf32> to vector<1x14x4xf32>
    %11 = vector.shape_cast %10 : vector<1x14x4xf32> to vector<14x4xf32>
    %12 = vector.extract_strided_slice %1 {offsets = [1, 2, 0], sizes = [1, 14, 4], strides = [1, 1, 1]} : vector<16x16x4xf32> to vector<1x14x4xf32>
    %13 = vector.shape_cast %12 : vector<1x14x4xf32> to vector<14x4xf32>
    %14 = vector.extract_strided_slice %1 {offsets = [2, 0, 0], sizes = [1, 14, 4], strides = [1, 1, 1]} : vector<16x16x4xf32> to vector<1x14x4xf32>
    %15 = vector.shape_cast %14 : vector<1x14x4xf32> to vector<14x4xf32>
    %16 = vector.extract_strided_slice %1 {offsets = [2, 1, 0], sizes = [1, 14, 4], strides = [1, 1, 1]} : vector<16x16x4xf32> to vector<1x14x4xf32>
    %17 = vector.shape_cast %16 : vector<1x14x4xf32> to vector<14x4xf32>
    %18 = vector.extract_strided_slice %1 {offsets = [2, 2, 0], sizes = [1, 14, 4], strides = [1, 1, 1]} : vector<16x16x4xf32> to vector<1x14x4xf32>
    %19 = vector.shape_cast %18 : vector<1x14x4xf32> to vector<14x4xf32>
    %20 = tpu.concatenate %3, %5, %7, %9, %11, %13, %15, %17, %19 in 1 : vector<14x4xf32>, vector<14x4xf32>, vector<14x4xf32>, vector<14x4xf32>, vector<14x4xf32>, vector<14x4xf32>, vector<14x4xf32>, vector<14x4xf32>, vector<14x4xf32> -> vector<14x36xf32>
    %21 = vector.extract_strided_slice %1 {offsets = [1, 0, 0], sizes = [1, 14, 4], strides = [1, 1, 1]} : vector<16x16x4xf32> to vector<1x14x4xf32>
    %22 = vector.shape_cast %21 : vector<1x14x4xf32> to vector<14x4xf32>
    %23 = vector.extract_strided_slice %1 {offsets = [1, 1, 0], sizes = [1, 14, 4], strides = [1, 1, 1]} : vector<16x16x4xf32> to vector<1x14x4xf32>
    %24 = vector.shape_cast %23 : vector<1x14x4xf32> to vector<14x4xf32>
    %25 = vector.extract_strided_slice %1 {offsets = [1, 2, 0], sizes = [1, 14, 4], strides = [1, 1, 1]} : vector<16x16x4xf32> to vector<1x14x4xf32>
    %26 = vector.shape_cast %25 : vector<1x14x4xf32> to vector<14x4xf32>
    %27 = vector.extract_strided_slice %1 {offsets = [2, 0, 0], sizes = [1, 14, 4], strides = [1, 1, 1]} : vector<16x16x4xf32> to vector<1x14x4xf32>
    %28 = vector.shape_cast %27 : vector<1x14x4xf32> to vector<14x4xf32>
    %29 = vector.extract_strided_slice %1 {offsets = [2, 1, 0], sizes = [1, 14, 4], strides = [1, 1, 1]} : vector<16x16x4xf32> to vector<1x14x4xf32>
    %30 = vector.shape_cast %29 : vector<1x14x4xf32> to vector<14x4xf32>
    %31 = vector.extract_strided_slice %1 {offsets = [2, 2, 0], sizes = [1, 14, 4], strides = [1, 1, 1]} : vector<16x16x4xf32> to vector<1x14x4xf32>
    %32 = vector.shape_cast %31 : vector<1x14x4xf32> to vector<14x4xf32>
    %33 = vector.extract_strided_slice %1 {offsets = [3, 0, 0], sizes = [1, 14, 4], strides = [1, 1, 1]} : vector<16x16x4xf32> to vector<1x14x4xf32>
    %34 = vector.shape_cast %33 : vector<1x14x4xf32> to vector<14x4xf32>
    %35 = vector.extract_strided_slice %1 {offsets = [3, 1, 0], sizes = [1, 14, 4], strides = [1, 1, 1]} : vector<16x16x4xf32> to vector<1x14x4xf32>
    %36 = vector.shape_cast %35 : vector<1x14x4xf32> to vector<14x4xf32>
    %37 = vector.extract_strided_slice %1 {offsets = [3, 2, 0], sizes = [1, 14, 4], strides = [1, 1, 1]} : vector<16x16x4xf32> to vector<1x14x4xf32>
    %38 = vector.shape_cast %37 : vector<1x14x4xf32> to vector<14x4xf32>
    %39 = tpu.concatenate %22, %24, %26, %28, %30, %32, %34, %36, %38 in 1 : vector<14x4xf32>, vector<14x4xf32>, vector<14x4xf32>, vector<14x4xf32>, vector<14x4xf32>, vector<14x4xf32>, vector<14x4xf32>, vector<14x4xf32>, vector<14x4xf32> -> vector<14x36xf32>
    %40 = vector.extract_strided_slice %1 {offsets = [2, 0, 0], sizes = [1, 14, 4], strides = [1, 1, 1]} : vector<16x16x4xf32> to vector<1x14x4xf32>
    %41 = vector.shape_cast %40 : vector<1x14x4xf32> to vector<14x4xf32>
    %42 = vector.extract_strided_slice %1 {offsets = [2, 1, 0], sizes = [1, 14, 4], strides = [1, 1, 1]} : vector<16x16x4xf32> to vector<1x14x4xf32>
    %43 = vector.shape_cast %42 : vector<1x14x4xf32> to vector<14x4xf32>
    %44 = vector.extract_strided_slice %1 {offsets = [2, 2, 0], sizes = [1, 14, 4], strides = [1, 1, 1]} : vector<16x16x4xf32> to vector<1x14x4xf32>
    %45 = vector.shape_cast %44 : vector<1x14x4xf32> to vector<14x4xf32>
    %46 = vector.extract_strided_slice %1 {offsets = [3, 0, 0], sizes = [1, 14, 4], strides = [1, 1, 1]} : vector<16x16x4xf32> to vector<1x14x4xf32>
    %47 = vector.shape_cast %46 : vector<1x14x4xf32> to vector<14x4xf32>
    %48 = vector.extract_strided_slice %1 {offsets = [3, 1, 0], sizes = [1, 14, 4], strides = [1, 1, 1]} : vector<16x16x4xf32> to vector<1x14x4xf32>
    %49 = vector.shape_cast %48 : vector<1x14x4xf32> to vector<14x4xf32>
    %50 = vector.extract_strided_slice %1 {offsets = [3, 2, 0], sizes = [1, 14, 4], strides = [1, 1, 1]} : vector<16x16x4xf32> to vector<1x14x4xf32>
    %51 = vector.shape_cast %50 : vector<1x14x4xf32> to vector<14x4xf32>
    %52 = vector.extract_strided_slice %1 {offsets = [4, 0, 0], sizes = [1, 14, 4], strides = [1, 1, 1]} : vector<16x16x4xf32> to vector<1x14x4xf32>
    %53 = vector.shape_cast %52 : vector<1x14x4xf32> to vector<14x4xf32>
    %54 = vector.extract_strided_slice %1 {offsets = [4, 1, 0], sizes = [1, 14, 4], strides = [1, 1, 1]} : vector<16x16x4xf32> to vector<1x14x4xf32>
    %55 = vector.shape_cast %54 : vector<1x14x4xf32> to vector<14x4xf32>
    %56 = vector.extract_strided_slice %1 {offsets = [4, 2, 0], sizes = [1, 14, 4], strides = [1, 1, 1]} : vector<16x16x4xf32> to vector<1x14x4xf32>
    %57 = vector.shape_cast %56 : vector<1x14x4xf32> to vector<14x4xf32>
    %58 = tpu.concatenate %41, %43, %45, %47, %49, %51, %53, %55, %57 in 1 : vector<14x4xf32>, vector<14x4xf32>, vector<14x4xf32>, vector<14x4xf32>, vector<14x4xf32>, vector<14x4xf32>, vector<14x4xf32>, vector<14x4xf32>, vector<14x4xf32> -> vector<14x36xf32>
    %59 = vector.extract_strided_slice %1 {offsets = [3, 0, 0], sizes = [1, 14, 4], strides = [1, 1, 1]} : vector<16x16x4xf32> to vector<1x14x4xf32>
    %60 = vector.shape_cast %59 : vector<1x14x4xf32> to vector<14x4xf32>
    %61 = vector.extract_strided_slice %1 {offsets = [3, 1, 0], sizes = [1, 14, 4], strides = [1, 1, 1]} : vector<16x16x4xf32> to vector<1x14x4xf32>
    %62 = vector.shape_cast %61 : vector<1x14x4xf32> to vector<14x4xf32>
    %63 = vector.extract_strided_slice %1 {offsets = [3, 2, 0], sizes = [1, 14, 4], strides = [1, 1, 1]} : vector<16x16x4xf32> to vector<1x14x4xf32>
    %64 = vector.shape_cast %63 : vector<1x14x4xf32> to vector<14x4xf32>
    %65 = vector.extract_strided_slice %1 {offsets = [4, 0, 0], sizes = [1, 14, 4], strides = [1, 1, 1]} : vector<16x16x4xf32> to vector<1x14x4xf32>
    %66 = vector.shape_cast %65 : vector<1x14x4xf32> to vector<14x4xf32>
    %67 = vector.extract_strided_slice %1 {offsets = [4, 1, 0], sizes = [1, 14, 4], strides = [1, 1, 1]} : vector<16x16x4xf32> to vector<1x14x4xf32>
    %68 = vector.shape_cast %67 : vector<1x14x4xf32> to vector<14x4xf32>
    %69 = vector.extract_strided_slice %1 {offsets = [4, 2, 0], sizes = [1, 14, 4], strides = [1, 1, 1]} : vector<16x16x4xf32> to vector<1x14x4xf32>
    %70 = vector.shape_cast %69 : vector<1x14x4xf32> to vector<14x4xf32>
    %71 = vector.extract_strided_slice %1 {offsets = [5, 0, 0], sizes = [1, 14, 4], strides = [1, 1, 1]} : vector<16x16x4xf32> to vector<1x14x4xf32>
    %72 = vector.shape_cast %71 : vector<1x14x4xf32> to vector<14x4xf32>
    %73 = vector.extract_strided_slice %1 {offsets = [5, 1, 0], sizes = [1, 14, 4], strides = [1, 1, 1]} : vector<16x16x4xf32> to vector<1x14x4xf32>
    %74 = vector.shape_cast %73 : vector<1x14x4xf32> to vector<14x4xf32>
    %75 = vector.extract_strided_slice %1 {offsets = [5, 2, 0], sizes = [1, 14, 4], strides = [1, 1, 1]} : vector<16x16x4xf32> to vector<1x14x4xf32>
    %76 = vector.shape_cast %75 : vector<1x14x4xf32> to vector<14x4xf32>
    %77 = tpu.concatenate %60, %62, %64, %66, %68, %70, %72, %74, %76 in 1 : vector<14x4xf32>, vector<14x4xf32>, vector<14x4xf32>, vector<14x4xf32>, vector<14x4xf32>, vector<14x4xf32>, vector<14x4xf32>, vector<14x4xf32>, vector<14x4xf32> -> vector<14x36xf32>
    %78 = vector.extract_strided_slice %1 {offsets = [4, 0, 0], sizes = [1, 14, 4], strides = [1, 1, 1]} : vector<16x16x4xf32> to vector<1x14x4xf32>
    %79 = vector.shape_cast %78 : vector<1x14x4xf32> to vector<14x4xf32>
    %80 = vector.extract_strided_slice %1 {offsets = [4, 1, 0], sizes = [1, 14, 4], strides = [1, 1, 1]} : vector<16x16x4xf32> to vector<1x14x4xf32>
    %81 = vector.shape_cast %80 : vector<1x14x4xf32> to vector<14x4xf32>
    %82 = vector.extract_strided_slice %1 {offsets = [4, 2, 0], sizes = [1, 14, 4], strides = [1, 1, 1]} : vector<16x16x4xf32> to vector<1x14x4xf32>
    %83 = vector.shape_cast %82 : vector<1x14x4xf32> to vector<14x4xf32>
    %84 = vector.extract_strided_slice %1 {offsets = [5, 0, 0], sizes = [1, 14, 4], strides = [1, 1, 1]} : vector<16x16x4xf32> to vector<1x14x4xf32>
    %85 = vector.shape_cast %84 : vector<1x14x4xf32> to vector<14x4xf32>
    %86 = vector.extract_strided_slice %1 {offsets = [5, 1, 0], sizes = [1, 14, 4], strides = [1, 1, 1]} : vector<16x16x4xf32> to vector<1x14x4xf32>
    %87 = vector.shape_cast %86 : vector<1x14x4xf32> to vector<14x4xf32>
    %88 = vector.extract_strided_slice %1 {offsets = [5, 2, 0], sizes = [1, 14, 4], strides = [1, 1, 1]} : vector<16x16x4xf32> to vector<1x14x4xf32>
    %89 = vector.shape_cast %88 : vector<1x14x4xf32> to vector<14x4xf32>
    %90 = vector.extract_strided_slice %1 {offsets = [6, 0, 0], sizes = [1, 14, 4], strides = [1, 1, 1]} : vector<16x16x4xf32> to vector<1x14x4xf32>
    %91 = vector.shape_cast %90 : vector<1x14x4xf32> to vector<14x4xf32>
    %92 = vector.extract_strided_slice %1 {offsets = [6, 1, 0], sizes = [1, 14, 4], strides = [1, 1, 1]} : vector<16x16x4xf32> to vector<1x14x4xf32>
    %93 = vector.shape_cast %92 : vector<1x14x4xf32> to vector<14x4xf32>
    %94 = vector.extract_strided_slice %1 {offsets = [6, 2, 0], sizes = [1, 14, 4], strides = [1, 1, 1]} : vector<16x16x4xf32> to vector<1x14x4xf32>
    %95 = vector.shape_cast %94 : vector<1x14x4xf32> to vector<14x4xf32>
    %96 = tpu.concatenate %79, %81, %83, %85, %87, %89, %91, %93, %95 in 1 : vector<14x4xf32>, vector<14x4xf32>, vector<14x4xf32>, vector<14x4xf32>, vector<14x4xf32>, vector<14x4xf32>, vector<14x4xf32>, vector<14x4xf32>, vector<14x4xf32> -> vector<14x36xf32>
    %97 = vector.extract_strided_slice %1 {offsets = [5, 0, 0], sizes = [1, 14, 4], strides = [1, 1, 1]} : vector<16x16x4xf32> to vector<1x14x4xf32>
    %98 = vector.shape_cast %97 : vector<1x14x4xf32> to vector<14x4xf32>
    %99 = vector.extract_strided_slice %1 {offsets = [5, 1, 0], sizes = [1, 14, 4], strides = [1, 1, 1]} : vector<16x16x4xf32> to vector<1x14x4xf32>
    %100 = vector.shape_cast %99 : vector<1x14x4xf32> to vector<14x4xf32>
    %101 = vector.extract_strided_slice %1 {offsets = [5, 2, 0], sizes = [1, 14, 4], strides = [1, 1, 1]} : vector<16x16x4xf32> to vector<1x14x4xf32>
    %102 = vector.shape_cast %101 : vector<1x14x4xf32> to vector<14x4xf32>
    %103 = vector.extract_strided_slice %1 {offsets = [6, 0, 0], sizes = [1, 14, 4], strides = [1, 1, 1]} : vector<16x16x4xf32> to vector<1x14x4xf32>
    %104 = vector.shape_cast %103 : vector<1x14x4xf32> to vector<14x4xf32>
    %105 = vector.extract_strided_slice %1 {offsets = [6, 1, 0], sizes = [1, 14, 4], strides = [1, 1, 1]} : vector<16x16x4xf32> to vector<1x14x4xf32>
    %106 = vector.shape_cast %105 : vector<1x14x4xf32> to vector<14x4xf32>
    %107 = vector.extract_strided_slice %1 {offsets = [6, 2, 0], sizes = [1, 14, 4], strides = [1, 1, 1]} : vector<16x16x4xf32> to vector<1x14x4xf32>
    %108 = vector.shape_cast %107 : vector<1x14x4xf32> to vector<14x4xf32>
    %109 = vector.extract_strided_slice %1 {offsets = [7, 0, 0], sizes = [1, 14, 4], strides = [1, 1, 1]} : vector<16x16x4xf32> to vector<1x14x4xf32>
    %110 = vector.shape_cast %109 : vector<1x14x4xf32> to vector<14x4xf32>
    %111 = vector.extract_strided_slice %1 {offsets = [7, 1, 0], sizes = [1, 14, 4], strides = [1, 1, 1]} : vector<16x16x4xf32> to vector<1x14x4xf32>
    %112 = vector.shape_cast %111 : vector<1x14x4xf32> to vector<14x4xf32>
    %113 = vector.extract_strided_slice %1 {offsets = [7, 2, 0], sizes = [1, 14, 4], strides = [1, 1, 1]} : vector<16x16x4xf32> to vector<1x14x4xf32>
    %114 = vector.shape_cast %113 : vector<1x14x4xf32> to vector<14x4xf32>
    %115 = tpu.concatenate %98, %100, %102, %104, %106, %108, %110, %112, %114 in 1 : vector<14x4xf32>, vector<14x4xf32>, vector<14x4xf32>, vector<14x4xf32>, vector<14x4xf32>, vector<14x4xf32>, vector<14x4xf32>, vector<14x4xf32>, vector<14x4xf32> -> vector<14x36xf32>
    %116 = vector.extract_strided_slice %1 {offsets = [6, 0, 0], sizes = [1, 14, 4], strides = [1, 1, 1]} : vector<16x16x4xf32> to vector<1x14x4xf32>
    %117 = vector.shape_cast %116 : vector<1x14x4xf32> to vector<14x4xf32>
    %118 = vector.extract_strided_slice %1 {offsets = [6, 1, 0], sizes = [1, 14, 4], strides = [1, 1, 1]} : vector<16x16x4xf32> to vector<1x14x4xf32>
    %119 = vector.shape_cast %118 : vector<1x14x4xf32> to vector<14x4xf32>
    %120 = vector.extract_strided_slice %1 {offsets = [6, 2, 0], sizes = [1, 14, 4], strides = [1, 1, 1]} : vector<16x16x4xf32> to vector<1x14x4xf32>
    %121 = vector.shape_cast %120 : vector<1x14x4xf32> to vector<14x4xf32>
    %122 = vector.extract_strided_slice %1 {offsets = [7, 0, 0], sizes = [1, 14, 4], strides = [1, 1, 1]} : vector<16x16x4xf32> to vector<1x14x4xf32>
    %123 = vector.shape_cast %122 : vector<1x14x4xf32> to vector<14x4xf32>
    %124 = vector.extract_strided_slice %1 {offsets = [7, 1, 0], sizes = [1, 14, 4], strides = [1, 1, 1]} : vector<16x16x4xf32> to vector<1x14x4xf32>
    %125 = vector.shape_cast %124 : vector<1x14x4xf32> to vector<14x4xf32>
    %126 = vector.extract_strided_slice %1 {offsets = [7, 2, 0], sizes = [1, 14, 4], strides = [1, 1, 1]} : vector<16x16x4xf32> to vector<1x14x4xf32>
    %127 = vector.shape_cast %126 : vector<1x14x4xf32> to vector<14x4xf32>
    %128 = vector.extract_strided_slice %1 {offsets = [8, 0, 0], sizes = [1, 14, 4], strides = [1, 1, 1]} : vector<16x16x4xf32> to vector<1x14x4xf32>
    %129 = vector.shape_cast %128 : vector<1x14x4xf32> to vector<14x4xf32>
    %130 = vector.extract_strided_slice %1 {offsets = [8, 1, 0], sizes = [1, 14, 4], strides = [1, 1, 1]} : vector<16x16x4xf32> to vector<1x14x4xf32>
    %131 = vector.shape_cast %130 : vector<1x14x4xf32> to vector<14x4xf32>
    %132 = vector.extract_strided_slice %1 {offsets = [8, 2, 0], sizes = [1, 14, 4], strides = [1, 1, 1]} : vector<16x16x4xf32> to vector<1x14x4xf32>
    %133 = vector.shape_cast %132 : vector<1x14x4xf32> to vector<14x4xf32>
    %134 = tpu.concatenate %117, %119, %121, %123, %125, %127, %129, %131, %133 in 1 : vector<14x4xf32>, vector<14x4xf32>, vector<14x4xf32>, vector<14x4xf32>, vector<14x4xf32>, vector<14x4xf32>, vector<14x4xf32>, vector<14x4xf32>, vector<14x4xf32> -> vector<14x36xf32>
    %135 = vector.extract_strided_slice %1 {offsets = [7, 0, 0], sizes = [1, 14, 4], strides = [1, 1, 1]} : vector<16x16x4xf32> to vector<1x14x4xf32>
    %136 = vector.shape_cast %135 : vector<1x14x4xf32> to vector<14x4xf32>
    %137 = vector.extract_strided_slice %1 {offsets = [7, 1, 0], sizes = [1, 14, 4], strides = [1, 1, 1]} : vector<16x16x4xf32> to vector<1x14x4xf32>
    %138 = vector.shape_cast %137 : vector<1x14x4xf32> to vector<14x4xf32>
    %139 = vector.extract_strided_slice %1 {offsets = [7, 2, 0], sizes = [1, 14, 4], strides = [1, 1, 1]} : vector<16x16x4xf32> to vector<1x14x4xf32>
    %140 = vector.shape_cast %139 : vector<1x14x4xf32> to vector<14x4xf32>
    %141 = vector.extract_strided_slice %1 {offsets = [8, 0, 0], sizes = [1, 14, 4], strides = [1, 1, 1]} : vector<16x16x4xf32> to vector<1x14x4xf32>
    %142 = vector.shape_cast %141 : vector<1x14x4xf32> to vector<14x4xf32>
    %143 = vector.extract_strided_slice %1 {offsets = [8, 1, 0], sizes = [1, 14, 4], strides = [1, 1, 1]} : vector<16x16x4xf32> to vector<1x14x4xf32>
    %144 = vector.shape_cast %143 : vector<1x14x4xf32> to vector<14x4xf32>
    %145 = vector.extract_strided_slice %1 {offsets = [8, 2, 0], sizes = [1, 14, 4], strides = [1, 1, 1]} : vector<16x16x4xf32> to vector<1x14x4xf32>
    %146 = vector.shape_cast %145 : vector<1x14x4xf32> to vector<14x4xf32>
    %147 = vector.extract_strided_slice %1 {offsets = [9, 0, 0], sizes = [1, 14, 4], strides = [1, 1, 1]} : vector<16x16x4xf32> to vector<1x14x4xf32>
    %148 = vector.shape_cast %147 : vector<1x14x4xf32> to vector<14x4xf32>
    %149 = vector.extract_strided_slice %1 {offsets = [9, 1, 0], sizes = [1, 14, 4], strides = [1, 1, 1]} : vector<16x16x4xf32> to vector<1x14x4xf32>
    %150 = vector.shape_cast %149 : vector<1x14x4xf32> to vector<14x4xf32>
    %151 = vector.extract_strided_slice %1 {offsets = [9, 2, 0], sizes = [1, 14, 4], strides = [1, 1, 1]} : vector<16x16x4xf32> to vector<1x14x4xf32>
    %152 = vector.shape_cast %151 : vector<1x14x4xf32> to vector<14x4xf32>
    %153 = tpu.concatenate %136, %138, %140, %142, %144, %146, %148, %150, %152 in 1 : vector<14x4xf32>, vector<14x4xf32>, vector<14x4xf32>, vector<14x4xf32>, vector<14x4xf32>, vector<14x4xf32>, vector<14x4xf32>, vector<14x4xf32>, vector<14x4xf32> -> vector<14x36xf32>
    %154 = vector.extract_strided_slice %1 {offsets = [8, 0, 0], sizes = [1, 14, 4], strides = [1, 1, 1]} : vector<16x16x4xf32> to vector<1x14x4xf32>
    %155 = vector.shape_cast %154 : vector<1x14x4xf32> to vector<14x4xf32>
    %156 = vector.extract_strided_slice %1 {offsets = [8, 1, 0], sizes = [1, 14, 4], strides = [1, 1, 1]} : vector<16x16x4xf32> to vector<1x14x4xf32>
    %157 = vector.shape_cast %156 : vector<1x14x4xf32> to vector<14x4xf32>
    %158 = vector.extract_strided_slice %1 {offsets = [8, 2, 0], sizes = [1, 14, 4], strides = [1, 1, 1]} : vector<16x16x4xf32> to vector<1x14x4xf32>
    %159 = vector.shape_cast %158 : vector<1x14x4xf32> to vector<14x4xf32>
    %160 = vector.extract_strided_slice %1 {offsets = [9, 0, 0], sizes = [1, 14, 4], strides = [1, 1, 1]} : vector<16x16x4xf32> to vector<1x14x4xf32>
    %161 = vector.shape_cast %160 : vector<1x14x4xf32> to vector<14x4xf32>
    %162 = vector.extract_strided_slice %1 {offsets = [9, 1, 0], sizes = [1, 14, 4], strides = [1, 1, 1]} : vector<16x16x4xf32> to vector<1x14x4xf32>
    %163 = vector.shape_cast %162 : vector<1x14x4xf32> to vector<14x4xf32>
    %164 = vector.extract_strided_slice %1 {offsets = [9, 2, 0], sizes = [1, 14, 4], strides = [1, 1, 1]} : vector<16x16x4xf32> to vector<1x14x4xf32>
    %165 = vector.shape_cast %164 : vector<1x14x4xf32> to vector<14x4xf32>
    %166 = vector.extract_strided_slice %1 {offsets = [10, 0, 0], sizes = [1, 14, 4], strides = [1, 1, 1]} : vector<16x16x4xf32> to vector<1x14x4xf32>
    %167 = vector.shape_cast %166 : vector<1x14x4xf32> to vector<14x4xf32>
    %168 = vector.extract_strided_slice %1 {offsets = [10, 1, 0], sizes = [1, 14, 4], strides = [1, 1, 1]} : vector<16x16x4xf32> to vector<1x14x4xf32>
    %169 = vector.shape_cast %168 : vector<1x14x4xf32> to vector<14x4xf32>
    %170 = vector.extract_strided_slice %1 {offsets = [10, 2, 0], sizes = [1, 14, 4], strides = [1, 1, 1]} : vector<16x16x4xf32> to vector<1x14x4xf32>
    %171 = vector.shape_cast %170 : vector<1x14x4xf32> to vector<14x4xf32>
    %172 = tpu.concatenate %155, %157, %159, %161, %163, %165, %167, %169, %171 in 1 : vector<14x4xf32>, vector<14x4xf32>, vector<14x4xf32>, vector<14x4xf32>, vector<14x4xf32>, vector<14x4xf32>, vector<14x4xf32>, vector<14x4xf32>, vector<14x4xf32> -> vector<14x36xf32>
    %173 = vector.extract_strided_slice %1 {offsets = [9, 0, 0], sizes = [1, 14, 4], strides = [1, 1, 1]} : vector<16x16x4xf32> to vector<1x14x4xf32>
    %174 = vector.shape_cast %173 : vector<1x14x4xf32> to vector<14x4xf32>
    %175 = vector.extract_strided_slice %1 {offsets = [9, 1, 0], sizes = [1, 14, 4], strides = [1, 1, 1]} : vector<16x16x4xf32> to vector<1x14x4xf32>
    %176 = vector.shape_cast %175 : vector<1x14x4xf32> to vector<14x4xf32>
    %177 = vector.extract_strided_slice %1 {offsets = [9, 2, 0], sizes = [1, 14, 4], strides = [1, 1, 1]} : vector<16x16x4xf32> to vector<1x14x4xf32>
    %178 = vector.shape_cast %177 : vector<1x14x4xf32> to vector<14x4xf32>
    %179 = vector.extract_strided_slice %1 {offsets = [10, 0, 0], sizes = [1, 14, 4], strides = [1, 1, 1]} : vector<16x16x4xf32> to vector<1x14x4xf32>
    %180 = vector.shape_cast %179 : vector<1x14x4xf32> to vector<14x4xf32>
    %181 = vector.extract_strided_slice %1 {offsets = [10, 1, 0], sizes = [1, 14, 4], strides = [1, 1, 1]} : vector<16x16x4xf32> to vector<1x14x4xf32>
    %182 = vector.shape_cast %181 : vector<1x14x4xf32> to vector<14x4xf32>
    %183 = vector.extract_strided_slice %1 {offsets = [10, 2, 0], sizes = [1, 14, 4], strides = [1, 1, 1]} : vector<16x16x4xf32> to vector<1x14x4xf32>
    %184 = vector.shape_cast %183 : vector<1x14x4xf32> to vector<14x4xf32>
    %185 = vector.extract_strided_slice %1 {offsets = [11, 0, 0], sizes = [1, 14, 4], strides = [1, 1, 1]} : vector<16x16x4xf32> to vector<1x14x4xf32>
    %186 = vector.shape_cast %185 : vector<1x14x4xf32> to vector<14x4xf32>
    %187 = vector.extract_strided_slice %1 {offsets = [11, 1, 0], sizes = [1, 14, 4], strides = [1, 1, 1]} : vector<16x16x4xf32> to vector<1x14x4xf32>
    %188 = vector.shape_cast %187 : vector<1x14x4xf32> to vector<14x4xf32>
    %189 = vector.extract_strided_slice %1 {offsets = [11, 2, 0], sizes = [1, 14, 4], strides = [1, 1, 1]} : vector<16x16x4xf32> to vector<1x14x4xf32>
    %190 = vector.shape_cast %189 : vector<1x14x4xf32> to vector<14x4xf32>
    %191 = tpu.concatenate %174, %176, %178, %180, %182, %184, %186, %188, %190 in 1 : vector<14x4xf32>, vector<14x4xf32>, vector<14x4xf32>, vector<14x4xf32>, vector<14x4xf32>, vector<14x4xf32>, vector<14x4xf32>, vector<14x4xf32>, vector<14x4xf32> -> vector<14x36xf32>
    %192 = vector.extract_strided_slice %1 {offsets = [10, 0, 0], sizes = [1, 14, 4], strides = [1, 1, 1]} : vector<16x16x4xf32> to vector<1x14x4xf32>
    %193 = vector.shape_cast %192 : vector<1x14x4xf32> to vector<14x4xf32>
    %194 = vector.extract_strided_slice %1 {offsets = [10, 1, 0], sizes = [1, 14, 4], strides = [1, 1, 1]} : vector<16x16x4xf32> to vector<1x14x4xf32>
    %195 = vector.shape_cast %194 : vector<1x14x4xf32> to vector<14x4xf32>
    %196 = vector.extract_strided_slice %1 {offsets = [10, 2, 0], sizes = [1, 14, 4], strides = [1, 1, 1]} : vector<16x16x4xf32> to vector<1x14x4xf32>
    %197 = vector.shape_cast %196 : vector<1x14x4xf32> to vector<14x4xf32>
    %198 = vector.extract_strided_slice %1 {offsets = [11, 0, 0], sizes = [1, 14, 4], strides = [1, 1, 1]} : vector<16x16x4xf32> to vector<1x14x4xf32>
    %199 = vector.shape_cast %198 : vector<1x14x4xf32> to vector<14x4xf32>
    %200 = vector.extract_strided_slice %1 {offsets = [11, 1, 0], sizes = [1, 14, 4], strides = [1, 1, 1]} : vector<16x16x4xf32> to vector<1x14x4xf32>
    %201 = vector.shape_cast %200 : vector<1x14x4xf32> to vector<14x4xf32>
    %202 = vector.extract_strided_slice %1 {offsets = [11, 2, 0], sizes = [1, 14, 4], strides = [1, 1, 1]} : vector<16x16x4xf32> to vector<1x14x4xf32>
    %203 = vector.shape_cast %202 : vector<1x14x4xf32> to vector<14x4xf32>
    %204 = vector.extract_strided_slice %1 {offsets = [12, 0, 0], sizes = [1, 14, 4], strides = [1, 1, 1]} : vector<16x16x4xf32> to vector<1x14x4xf32>
    %205 = vector.shape_cast %204 : vector<1x14x4xf32> to vector<14x4xf32>
    %206 = vector.extract_strided_slice %1 {offsets = [12, 1, 0], sizes = [1, 14, 4], strides = [1, 1, 1]} : vector<16x16x4xf32> to vector<1x14x4xf32>
    %207 = vector.shape_cast %206 : vector<1x14x4xf32> to vector<14x4xf32>
    %208 = vector.extract_strided_slice %1 {offsets = [12, 2, 0], sizes = [1, 14, 4], strides = [1, 1, 1]} : vector<16x16x4xf32> to vector<1x14x4xf32>
    %209 = vector.shape_cast %208 : vector<1x14x4xf32> to vector<14x4xf32>
    %210 = tpu.concatenate %193, %195, %197, %199, %201, %203, %205, %207, %209 in 1 : vector<14x4xf32>, vector<14x4xf32>, vector<14x4xf32>, vector<14x4xf32>, vector<14x4xf32>, vector<14x4xf32>, vector<14x4xf32>, vector<14x4xf32>, vector<14x4xf32> -> vector<14x36xf32>
    %211 = vector.extract_strided_slice %1 {offsets = [11, 0, 0], sizes = [1, 14, 4], strides = [1, 1, 1]} : vector<16x16x4xf32> to vector<1x14x4xf32>
    %212 = vector.shape_cast %211 : vector<1x14x4xf32> to vector<14x4xf32>
    %213 = vector.extract_strided_slice %1 {offsets = [11, 1, 0], sizes = [1, 14, 4], strides = [1, 1, 1]} : vector<16x16x4xf32> to vector<1x14x4xf32>
    %214 = vector.shape_cast %213 : vector<1x14x4xf32> to vector<14x4xf32>
    %215 = vector.extract_strided_slice %1 {offsets = [11, 2, 0], sizes = [1, 14, 4], strides = [1, 1, 1]} : vector<16x16x4xf32> to vector<1x14x4xf32>
    %216 = vector.shape_cast %215 : vector<1x14x4xf32> to vector<14x4xf32>
    %217 = vector.extract_strided_slice %1 {offsets = [12, 0, 0], sizes = [1, 14, 4], strides = [1, 1, 1]} : vector<16x16x4xf32> to vector<1x14x4xf32>
    %218 = vector.shape_cast %217 : vector<1x14x4xf32> to vector<14x4xf32>
    %219 = vector.extract_strided_slice %1 {offsets = [12, 1, 0], sizes = [1, 14, 4], strides = [1, 1, 1]} : vector<16x16x4xf32> to vector<1x14x4xf32>
    %220 = vector.shape_cast %219 : vector<1x14x4xf32> to vector<14x4xf32>
    %221 = vector.extract_strided_slice %1 {offsets = [12, 2, 0], sizes = [1, 14, 4], strides = [1, 1, 1]} : vector<16x16x4xf32> to vector<1x14x4xf32>
    %222 = vector.shape_cast %221 : vector<1x14x4xf32> to vector<14x4xf32>
    %223 = vector.extract_strided_slice %1 {offsets = [13, 0, 0], sizes = [1, 14, 4], strides = [1, 1, 1]} : vector<16x16x4xf32> to vector<1x14x4xf32>
    %224 = vector.shape_cast %223 : vector<1x14x4xf32> to vector<14x4xf32>
    %225 = vector.extract_strided_slice %1 {offsets = [13, 1, 0], sizes = [1, 14, 4], strides = [1, 1, 1]} : vector<16x16x4xf32> to vector<1x14x4xf32>
    %226 = vector.shape_cast %225 : vector<1x14x4xf32> to vector<14x4xf32>
    %227 = vector.extract_strided_slice %1 {offsets = [13, 2, 0], sizes = [1, 14, 4], strides = [1, 1, 1]} : vector<16x16x4xf32> to vector<1x14x4xf32>
    %228 = vector.shape_cast %227 : vector<1x14x4xf32> to vector<14x4xf32>
    %229 = tpu.concatenate %212, %214, %216, %218, %220, %222, %224, %226, %228 in 1 : vector<14x4xf32>, vector<14x4xf32>, vector<14x4xf32>, vector<14x4xf32>, vector<14x4xf32>, vector<14x4xf32>, vector<14x4xf32>, vector<14x4xf32>, vector<14x4xf32> -> vector<14x36xf32>
    %230 = vector.extract_strided_slice %1 {offsets = [12, 0, 0], sizes = [1, 14, 4], strides = [1, 1, 1]} : vector<16x16x4xf32> to vector<1x14x4xf32>
    %231 = vector.shape_cast %230 : vector<1x14x4xf32> to vector<14x4xf32>
    %232 = vector.extract_strided_slice %1 {offsets = [12, 1, 0], sizes = [1, 14, 4], strides = [1, 1, 1]} : vector<16x16x4xf32> to vector<1x14x4xf32>
    %233 = vector.shape_cast %232 : vector<1x14x4xf32> to vector<14x4xf32>
    %234 = vector.extract_strided_slice %1 {offsets = [12, 2, 0], sizes = [1, 14, 4], strides = [1, 1, 1]} : vector<16x16x4xf32> to vector<1x14x4xf32>
    %235 = vector.shape_cast %234 : vector<1x14x4xf32> to vector<14x4xf32>
    %236 = vector.extract_strided_slice %1 {offsets = [13, 0, 0], sizes = [1, 14, 4], strides = [1, 1, 1]} : vector<16x16x4xf32> to vector<1x14x4xf32>
    %237 = vector.shape_cast %236 : vector<1x14x4xf32> to vector<14x4xf32>
    %238 = vector.extract_strided_slice %1 {offsets = [13, 1, 0], sizes = [1, 14, 4], strides = [1, 1, 1]} : vector<16x16x4xf32> to vector<1x14x4xf32>
    %239 = vector.shape_cast %238 : vector<1x14x4xf32> to vector<14x4xf32>
    %240 = vector.extract_strided_slice %1 {offsets = [13, 2, 0], sizes = [1, 14, 4], strides = [1, 1, 1]} : vector<16x16x4xf32> to vector<1x14x4xf32>
    %241 = vector.shape_cast %240 : vector<1x14x4xf32> to vector<14x4xf32>
    %242 = vector.extract_strided_slice %1 {offsets = [14, 0, 0], sizes = [1, 14, 4], strides = [1, 1, 1]} : vector<16x16x4xf32> to vector<1x14x4xf32>
    %243 = vector.shape_cast %242 : vector<1x14x4xf32> to vector<14x4xf32>
    %244 = vector.extract_strided_slice %1 {offsets = [14, 1, 0], sizes = [1, 14, 4], strides = [1, 1, 1]} : vector<16x16x4xf32> to vector<1x14x4xf32>
    %245 = vector.shape_cast %244 : vector<1x14x4xf32> to vector<14x4xf32>
    %246 = vector.extract_strided_slice %1 {offsets = [14, 2, 0], sizes = [1, 14, 4], strides = [1, 1, 1]} : vector<16x16x4xf32> to vector<1x14x4xf32>
    %247 = vector.shape_cast %246 : vector<1x14x4xf32> to vector<14x4xf32>
    %248 = tpu.concatenate %231, %233, %235, %237, %239, %241, %243, %245, %247 in 1 : vector<14x4xf32>, vector<14x4xf32>, vector<14x4xf32>, vector<14x4xf32>, vector<14x4xf32>, vector<14x4xf32>, vector<14x4xf32>, vector<14x4xf32>, vector<14x4xf32> -> vector<14x36xf32>
    %249 = vector.extract_strided_slice %1 {offsets = [13, 0, 0], sizes = [1, 14, 4], strides = [1, 1, 1]} : vector<16x16x4xf32> to vector<1x14x4xf32>
    %250 = vector.shape_cast %249 : vector<1x14x4xf32> to vector<14x4xf32>
    %251 = vector.extract_strided_slice %1 {offsets = [13, 1, 0], sizes = [1, 14, 4], strides = [1, 1, 1]} : vector<16x16x4xf32> to vector<1x14x4xf32>
    %252 = vector.shape_cast %251 : vector<1x14x4xf32> to vector<14x4xf32>
    %253 = vector.extract_strided_slice %1 {offsets = [13, 2, 0], sizes = [1, 14, 4], strides = [1, 1, 1]} : vector<16x16x4xf32> to vector<1x14x4xf32>
    %254 = vector.shape_cast %253 : vector<1x14x4xf32> to vector<14x4xf32>
    %255 = vector.extract_strided_slice %1 {offsets = [14, 0, 0], sizes = [1, 14, 4], strides = [1, 1, 1]} : vector<16x16x4xf32> to vector<1x14x4xf32>
    %256 = vector.shape_cast %255 : vector<1x14x4xf32> to vector<14x4xf32>
    %257 = vector.extract_strided_slice %1 {offsets = [14, 1, 0], sizes = [1, 14, 4], strides = [1, 1, 1]} : vector<16x16x4xf32> to vector<1x14x4xf32>
    %258 = vector.shape_cast %257 : vector<1x14x4xf32> to vector<14x4xf32>
    %259 = vector.extract_strided_slice %1 {offsets = [14, 2, 0], sizes = [1, 14, 4], strides = [1, 1, 1]} : vector<16x16x4xf32> to vector<1x14x4xf32>
    %260 = vector.shape_cast %259 : vector<1x14x4xf32> to vector<14x4xf32>
    %261 = vector.extract_strided_slice %1 {offsets = [15, 0, 0], sizes = [1, 14, 4], strides = [1, 1, 1]} : vector<16x16x4xf32> to vector<1x14x4xf32>
    %262 = vector.shape_cast %261 : vector<1x14x4xf32> to vector<14x4xf32>
    %263 = vector.extract_strided_slice %1 {offsets = [15, 1, 0], sizes = [1, 14, 4], strides = [1, 1, 1]} : vector<16x16x4xf32> to vector<1x14x4xf32>
    %264 = vector.shape_cast %263 : vector<1x14x4xf32> to vector<14x4xf32>
    %265 = vector.extract_strided_slice %1 {offsets = [15, 2, 0], sizes = [1, 14, 4], strides = [1, 1, 1]} : vector<16x16x4xf32> to vector<1x14x4xf32>
    %266 = vector.shape_cast %265 : vector<1x14x4xf32> to vector<14x4xf32>
    %267 = tpu.concatenate %250, %252, %254, %256, %258, %260, %262, %264, %266 in 1 : vector<14x4xf32>, vector<14x4xf32>, vector<14x4xf32>, vector<14x4xf32>, vector<14x4xf32>, vector<14x4xf32>, vector<14x4xf32>, vector<14x4xf32>, vector<14x4xf32> -> vector<14x36xf32>
    %268 = tpu.concatenate %20, %39, %58, %77, %96, %115, %134, %153, %172, %191, %210, %229, %248, %267 in 0 : vector<14x36xf32>, vector<14x36xf32>, vector<14x36xf32>, vector<14x36xf32>, vector<14x36xf32>, vector<14x36xf32>, vector<14x36xf32>, vector<14x36xf32>, vector<14x36xf32>, vector<14x36xf32>, vector<14x36xf32>, vector<14x36xf32>, vector<14x36xf32>, vector<14x36xf32> -> vector<196x36xf32>
    %c0_3 = arith.constant 0 : index
    %c0_4 = arith.constant 0 : index
    %269 = vector.load %arg2[%c0_3, %c0_4] : memref<36x8xf32, #tpu.memory_space<vmem>>, vector<36x8xf32>
    %cst = arith.constant dense<0.000000e+00> : vector<196x8xf32>
    %270 = tpu.matmul %268, %269, %cst {dimension_numbers = #tpu.dot_dimension_numbers<[1], [0], [0], [1], [0, 0, 1, 1], [], []>} : vector<196x36xf32>, vector<36x8xf32>, vector<196x8xf32> -> vector<196x8xf32>
    %271 = tpu.transpose %270, [1, 0] : vector<196x8xf32> -> vector<8x196xf32>
    %c0_5 = arith.constant 0 : index
    %c0_6 = arith.constant 0 : index
    %272 = vector.load %arg3[%c0_5, %c0_6] : memref<8x1xf32, #tpu.memory_space<vmem>>, vector<8x1xf32>
    %273 = vector.broadcast %272 : vector<8x1xf32> to vector<8x196xf32>
    %274 = arith.addf %271, %273 : vector<8x196xf32>
    %c0_7 = arith.constant 0 : index
    %c0_8 = arith.constant 0 : index
    %c0_9 = arith.constant 0 : index
    %275 = vector.load %arg4[%c0_7, %c0_8, %c0_9] : memref<1x8x196xf32, #tpu.memory_space<vmem>>, vector<1x8x196xf32>
    %276 = vector.shape_cast %275 : vector<1x8x196xf32> to vector<8x196xf32>
    %277 = vector.shape_cast %274 : vector<8x196xf32> to vector<1x8x196xf32>
    tpu.vector_store %arg4[%c0_7, %c0_8, %c0_9], %277 {strides = array<i32>} : memref<1x8x196xf32, #tpu.memory_space<vmem>>, vector<1x8x196xf32>,
    return
  }
  func.func @transform_0(%arg0: i32) -> (i32, i32, i32, i32) {
    %c0_i32 = arith.constant 0 : i32
    %c0_i32_0 = arith.constant 0 : i32
    %c0_i32_1 = arith.constant 0 : i32
    %c0_i32_2 = arith.constant 0 : i32
    return %arg0, %c0_i32, %c0_i32_0, %c0_i32_1 : i32, i32, i32, i32
  }
  func.func @transform_1(%arg0: i32) -> (i32, i32) {
    %c0_i32 = arith.constant 0 : i32
    %c0_i32_0 = arith.constant 0 : i32
    %c0_i32_1 = arith.constant 0 : i32
    return %c0_i32, %c0_i32_0 : i32, i32
  }
  func.func @transform_2(%arg0: i32) -> (i32, i32) {
    %c0_i32 = arith.constant 0 : i32
    %c0_i32_0 = arith.constant 0 : i32
    %c0_i32_1 = arith.constant 0 : i32
    return %c0_i32, %c0_i32_0 : i32, i32
  }
  func.func @transform_3(%arg0: i32) -> (i32, i32, i32) {
    %c0_i32 = arith.constant 0 : i32
    %c0_i32_0 = arith.constant 0 : i32
    %c0_i32_1 = arith.constant 0 : i32
    return %arg0, %c0_i32, %c0_i32_0 : i32, i32, i32
  }
}

</mosaic_0001>

<llo_original>
// kernel: concat_conv2d.1
$region0: #{concat_conv2d.1}
  #allocation0 [shape = 'u32[]', space=smem, size = 0x4, offset = 0x4, fixed_abs, tag = 'smem constant byte address 0x4 - core index']
  #allocation1 [shape = 'u32[144,128]{1,0:T(1,128)}', space=vmem, size = 0x12000, scoped, tag = 'internal scratch']
  %s0 = inlined_call_operand.vmem [shape: f32[2,16,16,4], index: 0, kind: input, shape index: {}]
  %s1 = inlined_call_operand.vmem [shape: f32[36,8], index: 1, kind: input, shape index: {}]
  %s2 = inlined_call_operand.vmem [shape: f32[8,1], index: 2, kind: input, shape index: {}]
  %s3 = inlined_call_operand.vmem [shape: f32[2,8,196], index: 3, kind: output, shape index: {}]
  %s4 = sld [smem:[#allocation0]]
  $region45: #{concat_conv2d.1} parent=0
    _
  %s6 = ssub.s32 1, %s4
  %s7 = scalar_select 0, %s6, %s4
  loop: start=0, step=1, limit=4
  $region2: #{concat_conv2d.1} parent=0 // loop_pre_header
    _
  $region3: #{concat_conv2d.1} parent=0 // loop_header
    %s9 = sphi 0, %s13
    %p10 = scmp.ge.s32.totalorder %s9, 4
    %s19 = sphi 0, %s21
    %s22 = sphi 0, %s19
    %s23 = sphi 0, %s22
    %s39 = sphi 0, %s23
    %s43 = sphi 0, %s43
    %s45 = sphi 0, %s43
    %s46 = sphi 0, %s45
    %s60 = sphi 0, %s46
    %s64 = sphi 0, %s64
    %s66 = sphi 0, %s64
    %s67 = sphi 0, %s66
    %s81 = sphi 0, %s67
    %s87 = sphi 0, %s89
    %s90 = sphi 0, %s87
    %s91 = sphi 0, %s90
    %s107 = sphi 0, %s91
  $region4: #{concat_conv2d.1} parent=0 // loop_header_branch
    %12 = sbr.rel (%p10) target = $region8
  $region5: #{concat_conv2d.1} parent=0 // loop_body
    %s14 = ssub.s32 %s9, 1
    %s15 = ssub.s32 %s9, 2
    %s16 = sadd.s32 %s9, 1
    %s17 = ssub.s32 %s9, %s16
    %p18 = scmp.eq.s32.totalorder %s17, 0
    %s20 = sadd.s32 %s19, 1
    %s21 = scalar_select %p18, %s19, %s20
    %p24 = pneg %p18
    %p25 = scmp.eq.s32.totalorder %s9, 1
    %p26 = por %p24, %p25
    %p27 = scmp.ne.s32.totalorder %s19, %s22
    %p28 = scmp.eq.s32.totalorder %s9, 0
    %p29 = por %p27, %p28
    %p30 = scmp.ne.s32.totalorder %s19, %s22
    %p31 = scmp.eq.s32.totalorder %s14, 1
    %p32 = por %p30, %p31
    %p33 = scmp.ne.s32.totalorder %s22, %s23
    %p34 = scmp.eq.s32.totalorder %s14, 0
    %p35 = por %p33, %p34
    %p36 = scmp.ne.s32.totalorder %s22, %s23
    %p37 = scmp.eq.s32.totalorder %s15, 1
    %p38 = por %p36, %p37
    %p40 = scmp.ne.s32.totalorder %s23, %s39
    %p41 = scmp.eq.s32.totalorder %s15, 0
    %p42 = por %p40, %p41
    %s44 = sadd.s32 %s43, 1
    %p47 = scmp.eq.s32.totalorder %s9, 1
    %p48 = scmp.ne.s32.totalorder %s43, %s45
    %p49 = scmp.eq.s32.totalorder %s9, 0
    %p50 = por %p48, %p49
    %p51 = scmp.ne.s32.totalorder %s43, %s45
    %p52 = scmp.eq.s32.totalorder %s14, 1
    %p53 = por %p51, %p52
    %p54 = scmp.ne.s32.totalorder %s45, %s46
    %p55 = scmp.eq.s32.totalorder %s14, 0
    %p56 = por %p54, %p55
    %p57 = scmp.ne.s32.totalorder %s45, %s46
    %p58 = scmp.eq.s32.totalorder %s15, 1
    %p59 = por %p57, %p58
    %p61 = scmp.ne.s32.totalorder %s46, %s60
    %p62 = scmp.eq.s32.totalorder %s15, 0
    %p63 = por %p61, %p62
    %s65 = sadd.s32 %s64, 1
    %p68 = scmp.eq.s32.totalorder %s9, 1
    %p69 = scmp.ne.s32.totalorder %s64, %s66
    %p70 = scmp.eq.s32.totalorder %s9, 0
    %p71 = por %p69, %p70
    %p72 = scmp.ne.s32.totalorder %s64, %s66
    %p73 = scmp.eq.s32.totalorder %s14, 1
    %p74 = por %p72, %p73
    %p75 = scmp.ne.s32.totalorder %s66, %s67
    %p76 = scmp.eq.s32.totalorder %s14, 0
    %p77 = por %p75, %p76
    %p78 = scmp.ne.s32.totalorder %s66, %s67
    %p79 = scmp.eq.s32.totalorder %s15, 1
    %p80 = por %p78, %p79
    %p82 = scmp.ne.s32.totalorder %s67, %s81
    %p83 = scmp.eq.s32.totalorder %s15, 0
    %p84 = por %p82, %p83
    %s85 = ssub.s32 %s9, %s16
    %p86 = scmp.eq.s32.totalorder %s85, 0
    %s88 = sadd.s32 %s87, 1
    %s89 = scalar_select %p86, %s87, %s88
    %p92 = pneg %p86
    %p93 = scmp.eq.s32.totalorder %s9, 1
    %p94 = por %p92, %p93
    %p95 = scmp.ne.s32.totalorder %s87, %s90
    %p96 = scmp.eq.s32.totalorder %s9, 0
    %p97 = por %p95, %p96
    %p98 = scmp.ne.s32.totalorder %s87, %s90
    %p99 = scmp.eq.s32.totalorder %s14, 1
    %p100 = por %p98, %p99
    %p101 = scmp.ne.s32.totalorder %s90, %s91
    %p102 = scmp.eq.s32.totalorder %s14, 0
    %p103 = por %p101, %p102
    %p104 = scmp.ne.s32.totalorder %s90, %s91
    %p105 = scmp.eq.s32.totalorder %s15, 1
    %p106 = por %p104, %p105
    %p108 = scmp.ne.s32.totalorder %s91, %s107
    %p109 = scmp.eq.s32.totalorder %s15, 0
    %p110 = por %p108, %p109
    %p111 = scmp.le.s32.totalorder 1, %s9
    %p112 = scmp.lt.s32.totalorder %s9, 3
    %p113 = pnand %p111, %p112
    %p114 = pneg %p113
    // Predicated region
    $region9: #{concat_conv2d.1} parent=5 // pred_check
      _
    $region10: #{concat_conv2d.1} parent=5 // pred_check_branch
      %116 = sbr.rel (%p113) target = $region12
    $region11: #{concat_conv2d.1} parent=5 // pred_region
      %s117 = ssub.s32 %s9, 1
      // Predicated region
      $region13: #{concat_conv2d.1} parent=11 // pred_check
        %p118 = pneg %p56
      $region14: #{concat_conv2d.1} parent=11 // pred_check_branch
        %120 = sbr.rel (%p118) target = $region16
      $region15: #{concat_conv2d.1} parent=11 // pred_region
        _
      $region16: #{concat_conv2d.1} parent=11 // pred_fallthru
        _
      // Predicated region
      $region17: #{concat_conv2d.1} parent=11 // pred_check
        %p121 = pneg %p77
      $region18: #{concat_conv2d.1} parent=11 // pred_check_branch
        %123 = sbr.rel (%p121) target = $region20
      $region19: #{concat_conv2d.1} parent=11 // pred_region
        _
      $region20: #{concat_conv2d.1} parent=11 // pred_fallthru
        _
    $region12: #{concat_conv2d.1} parent=5 // pred_fallthru
      _
    %p124 = scmp.lt.s32.totalorder %s9, 2
    // Predicated region
    $region21: #{concat_conv2d.1} parent=5 // pred_check
      %p125 = pneg %p124
    $region22: #{concat_conv2d.1} parent=5 // pred_check_branch
      %127 = sbr.rel (%p125) target = $region24
    $region23: #{concat_conv2d.1} parent=5 // pred_region
      // Predicated region
      $region25: #{concat_conv2d.1} parent=23 // pred_check
        %p128 = pneg %p29
      $region26: #{concat_conv2d.1} parent=23 // pred_check_branch
        %130 = sbr.rel (%p128) target = $region28
      $region27: #{concat_conv2d.1} parent=23 // pred_region
        %p131 = scmp.lt.s32.totalorder %s9, 1
        %s132 = scalar_select %p131, %s9, 1
        %s133 = smul.addr %s132, 32
        %s134 = smul.addr %s133, 8
        %s135 = scalar_lea.vmem %s0, %s134
      $region28: #{concat_conv2d.1} parent=23 // pred_fallthru
        _
    $region24: #{concat_conv2d.1} parent=5 // pred_fallthru
      _
    %p136 = scmp.le.s32.totalorder 1, %s9
    %p137 = scmp.lt.s32.totalorder %s9, 3
    %p138 = pnand %p136, %p137
    %p139 = pneg %p138
    // Predicated region
    $region29: #{concat_conv2d.1} parent=5 // pred_check
      _
    $region30: #{concat_conv2d.1} parent=5 // pred_check_branch
      %141 = sbr.rel (%p138) target = $region32
    $region31: #{concat_conv2d.1} parent=5 // pred_region
      %s142 = ssub.s32 %s9, 1
      %p143 = scmp.lt.s32.totalorder %s14, 1
      %s144 = scalar_select %p143, %s14, 1
      %s145 = smul.addr %s144, 32
      %s146 = smul.addr %s145, 8
      %s147 = scalar_lea.vmem %s0, %s146
      %p148 = pneg %p35
      %p149 = pneg %p32
      %p150 = pneg %p56
      %p151 = pneg %p53
      %p152 = pneg %p77
      %p153 = pneg %p74
      %p154 = pneg %p103
      %p155 = pneg %p100
      %p156 = scmp.lt.s32.totalorder %s14, 1
      %s157 = scalar_select %p156, %s14, 1
      %s158 = smul.addr %s157, 2
      %s159 = smul.addr %s158, 8
      %s160 = scalar_lea.vmem %s3, %s159
      %p161 = scmp.lt.s32.totalorder %s14, 1
      %s162 = scalar_select %p161, %s14, 1
      %s163 = smul.addr %s162, 32
      %s164 = smul.addr %s163, 8
      %s165 = scalar_lea.vmem %s0, %s164
      %p166 = scmp.lt.s32.totalorder %s14, 1
      %s167 = scalar_select %p166, %s14, 1
      %s168 = smul.addr %s167, 2
      %s169 = smul.addr %s168, 8
      %s170 = scalar_lea.vmem %s3, %s169
      %v171 = vld [vmem:[%s165] sm:$0xff]
      %v172 = vld [vmem:[%s165 + $0x8] sm:$0xff]
      %v173 = vld [vmem:[%s165 + $0x10] sm:$0xff]
      %v174 = vld [vmem:[%s165 + $0x18] sm:$0xff]
      %v175 = vld [vmem:[%s165 + $0x20] sm:$0xff]
      %v176 = vld [vmem:[%s165 + $0x28] sm:$0xff]
      %v177 = vld [vmem:[%s165 + $0x30] sm:$0xff]
      %v178 = vld [vmem:[%s165 + $0x38] sm:$0xff]
      %v179 = vld [vmem:[%s165 + $0x40] sm:$0xff]
      %v180 = vld [vmem:[%s165 + $0x48] sm:$0xff]
      %v181 = vld [vmem:[%s165 + $0x50] sm:$0xff]
      %v182 = vld [vmem:[%s165 + $0x58] sm:$0xff]
      %v183 = vld [vmem:[%s165 + $0x60] sm:$0xff]
      %v184 = vld [vmem:[%s165 + $0x68] sm:$0xff]
      %v185 = vld [vmem:[%s165 + $0x70] sm:$0xff]
      %v186 = vld [vmem:[%s165 + $0x78] sm:$0xff]
      %v187 = vld [vmem:[%s165 + $0x80] sm:$0xff]
      %v188 = vld [vmem:[%s165 + $0x88] sm:$0xff]
      %v189 = vld [vmem:[%s165 + $0x90] sm:$0xff]
      %v190 = vld [vmem:[%s165 + $0x98] sm:$0xff]
      %v191 = vld [vmem:[%s165 + $0xa0] sm:$0xff]
      %v192 = vld [vmem:[%s165 + $0xa8] sm:$0xff]
      %v193 = vld [vmem:[%s165 + $0xb0] sm:$0xff]
      %v194 = vld [vmem:[%s165 + $0xb8] sm:$0xff]
      %v195 = vld [vmem:[%s165 + $0xc0] sm:$0xff]
      %v196 = vld [vmem:[%s165 + $0xc8] sm:$0xff]
      %v197 = vld [vmem:[%s165 + $0xd0] sm:$0xff]
      %v198 = vld [vmem:[%s165 + $0xd8] sm:$0xff]
      %v199 = vld [vmem:[%s165 + $0xe0] sm:$0xff]
      %v200 = vld [vmem:[%s165 + $0xe8] sm:$0xff]
      %v201 = vld [vmem:[%s165 + $0xf0] sm:$0xff]
      %v202 = vld [vmem:[%s165 + $0xf8] sm:$0xff]
      %vm205 = vcmask 1046528
      %v206 = vrot.slane %v171, 1
      %v207 = vrot.slane %v172, 1
      %v208 = vsel %vm205, %v206, %v207
      %209 = vrot.lane.b32.xlu0 %v208, 4
      %v210 = vpop.permute.xlu0 %209
      %211 = vrot.lane.b32.xlu0 %v207, 4
      %v212 = vpop.permute.xlu0 %211
      %vm215 = vcmask 1045504
      %v216 = vrot.slane %v171, 2
      %v217 = vrot.slane %v172, 2
      %v218 = vsel %vm215, %v216, %v217
      %219 = vrot.lane.b32.xlu0 %v218, 8
      %v220 = vpop.permute.xlu0 %219
      %221 = vrot.lane.b32.xlu0 %v217, 8
      %v222 = vpop.permute.xlu0 %221
      %227 = vrot.lane.b32.xlu0 %v173, 12
      %v228 = vpop.permute.xlu0 %227
      %229 = vrot.lane.b32.xlu0 %v174, 12
      %v230 = vpop.permute.xlu0 %229
      %v233 = vrot.slane %v173, 1
      %v234 = vrot.slane %v174, 1
      %v235 = vsel %vm205, %v233, %v234
      %236 = vrot.lane.b32.xlu0 %v235, 16
      %v237 = vpop.permute.xlu0 %236
      %238 = vrot.lane.b32.xlu0 %v234, 16
      %v239 = vpop.permute.xlu0 %238
      %v242 = vrot.slane %v173, 2
      %v243 = vrot.slane %v174, 2
      %v244 = vsel %vm215, %v242, %v243
      %245 = vrot.lane.b32.xlu0 %v244, 20
      %v246 = vpop.permute.xlu0 %245
      %247 = vrot.lane.b32.xlu0 %v243, 20
      %v248 = vpop.permute.xlu0 %247
      %253 = vrot.lane.b32.xlu0 %v175, 24
      %v254 = vpop.permute.xlu0 %253
      %255 = vrot.lane.b32.xlu0 %v176, 24
      %v256 = vpop.permute.xlu0 %255
      %v259 = vrot.slane %v175, 1
      %v260 = vrot.slane %v176, 1
      %v261 = vsel %vm205, %v259, %v260
      %262 = vrot.lane.b32.xlu0 %v261, 28
      %v263 = vpop.permute.xlu0 %262
      %264 = vrot.lane.b32.xlu0 %v260, 28
      %v265 = vpop.permute.xlu0 %264
      %v268 = vrot.slane %v175, 2
      %v269 = vrot.slane %v176, 2
      %v270 = vsel %vm215, %v268, %v269
      %271 = vrot.lane.b32.xlu0 %v270, 32
      %v272 = vpop.permute.xlu0 %271
      %273 = vrot.lane.b32.xlu0 %v269, 32
      %v274 = vpop.permute.xlu0 %273
      %vm277 = vcmask 31744
      %v278 = vsel %vm277, %v171, %v210
      %v279 = vsel %vm277, %v172, %v212
      %vm280 = vcmask 64512
      %v281 = vsel %vm280, %v278, %v220
      %v282 = vsel %vm280, %v279, %v222
      %vm283 = vcmask 97280
      %v284 = vsel %vm283, %v281, %v228
      %v285 = vsel %vm283, %v282, %v230
      %vm286 = vcmask 130048
      %v287 = vsel %vm286, %v284, %v237
      %v288 = vsel %vm286, %v285, %v239
      %vm289 = vcmask 162816
      %v290 = vsel %vm289, %v287, %v246
      %v291 = vsel %vm289, %v288, %v248
      %vm292 = vcmask 195584
      %v293 = vsel %vm292, %v290, %v254
      %v294 = vsel %vm292, %v291, %v256
      %vm295 = vcmask 228352
      %v296 = vsel %vm295, %v293, %v263
      %v297 = vsel %vm295, %v294, %v265
      %vm298 = vcmask 261120
      %v299 = vsel %vm298, %v296, %v272
      %v300 = vsel %vm298, %v297, %v274
      %301 = vrot.lane.b32.xlu0 %v235, 4
      %v302 = vpop.permute.xlu0 %301
      %303 = vrot.lane.b32.xlu0 %v234, 4
      %v304 = vpop.permute.xlu0 %303
      %307 = vrot.lane.b32.xlu0 %v244, 8
      %v308 = vpop.permute.xlu0 %307
      %309 = vrot.lane.b32.xlu0 %v243, 8
      %v310 = vpop.permute.xlu0 %309
      %313 = vrot.lane.b32.xlu0 %v175, 12
      %v314 = vpop.permute.xlu0 %313
      %315 = vrot.lane.b32.xlu0 %v176, 12
      %v316 = vpop.permute.xlu0 %315
      %319 = vrot.lane.b32.xlu0 %v261, 16
      %v320 = vpop.permute.xlu0 %319
      %321 = vrot.lane.b32.xlu0 %v260, 16
      %v322 = vpop.permute.xlu0 %321
      %325 = vrot.lane.b32.xlu0 %v270, 20
      %v326 = vpop.permute.xlu0 %325
      %327 = vrot.lane.b32.xlu0 %v269, 20
      %v328 = vpop.permute.xlu0 %327
      %333 = vrot.lane.b32.xlu0 %v177, 24
      %v334 = vpop.permute.xlu0 %333
      %335 = vrot.lane.b32.xlu0 %v178, 24
      %v336 = vpop.permute.xlu0 %335
      %v339 = vrot.slane %v177, 1
      %v340 = vrot.slane %v178, 1
      %v341 = vsel %vm205, %v339, %v340
      %342 = vrot.lane.b32.xlu0 %v341, 28
      %v343 = vpop.permute.xlu0 %342
      %344 = vrot.lane.b32.xlu0 %v340, 28
      %v345 = vpop.permute.xlu0 %344
      %v348 = vrot.slane %v177, 2
      %v349 = vrot.slane %v178, 2
      %v350 = vsel %vm215, %v348, %v349
      %351 = vrot.lane.b32.xlu0 %v350, 32
      %v352 = vpop.permute.xlu0 %351
      %353 = vrot.lane.b32.xlu0 %v349, 32
      %v354 = vpop.permute.xlu0 %353
      %v357 = vsel %vm277, %v173, %v302
      %v358 = vsel %vm277, %v174, %v304
      %v359 = vsel %vm280, %v357, %v308
      %v360 = vsel %vm280, %v358, %v310
      %v361 = vsel %vm283, %v359, %v314
      %v362 = vsel %vm283, %v360, %v316
      %v363 = vsel %vm286, %v361, %v320
      %v364 = vsel %vm286, %v362, %v322
      %v365 = vsel %vm289, %v363, %v326
      %v366 = vsel %vm289, %v364, %v328
      %v367 = vsel %vm292, %v365, %v334
      %v368 = vsel %vm292, %v366, %v336
      %v369 = vsel %vm295, %v367, %v343
      %v370 = vsel %vm295, %v368, %v345
      %v371 = vsel %vm298, %v369, %v352
      %v372 = vsel %vm298, %v370, %v354
      %373 = vrot.lane.b32.xlu0 %v261, 4
      %v374 = vpop.permute.xlu0 %373
      %375 = vrot.lane.b32.xlu0 %v260, 4
      %v376 = vpop.permute.xlu0 %375
      %379 = vrot.lane.b32.xlu0 %v270, 8
      %v380 = vpop.permute.xlu0 %379
      %381 = vrot.lane.b32.xlu0 %v269, 8
      %v382 = vpop.permute.xlu0 %381
      %385 = vrot.lane.b32.xlu0 %v177, 12
      %v386 = vpop.permute.xlu0 %385
      %387 = vrot.lane.b32.xlu0 %v178, 12
      %v388 = vpop.permute.xlu0 %387
      %391 = vrot.lane.b32.xlu0 %v341, 16
      %v392 = vpop.permute.xlu0 %391
      %393 = vrot.lane.b32.xlu0 %v340, 16
      %v394 = vpop.permute.xlu0 %393
      %397 = vrot.lane.b32.xlu0 %v350, 20
      %v398 = vpop.permute.xlu0 %397
      %399 = vrot.lane.b32.xlu0 %v349, 20
      %v400 = vpop.permute.xlu0 %399
      %405 = vrot.lane.b32.xlu0 %v179, 24
      %v406 = vpop.permute.xlu0 %405
      %407 = vrot.lane.b32.xlu0 %v180, 24
      %v408 = vpop.permute.xlu0 %407
      %v411 = vrot.slane %v179, 1
      %v412 = vrot.slane %v180, 1
      %v413 = vsel %vm205, %v411, %v412
      %414 = vrot.lane.b32.xlu0 %v413, 28
      %v415 = vpop.permute.xlu0 %414
      %416 = vrot.lane.b32.xlu0 %v412, 28
      %v417 = vpop.permute.xlu0 %416
      %v420 = vrot.slane %v179, 2
      %v421 = vrot.slane %v180, 2
      %v422 = vsel %vm215, %v420, %v421
      %423 = vrot.lane.b32.xlu0 %v422, 32
      %v424 = vpop.permute.xlu0 %423
      %425 = vrot.lane.b32.xlu0 %v421, 32
      %v426 = vpop.permute.xlu0 %425
      %v429 = vsel %vm277, %v175, %v374
      %v430 = vsel %vm277, %v176, %v376
      %v431 = vsel %vm280, %v429, %v380
      %v432 = vsel %vm280, %v430, %v382
      %v433 = vsel %vm283, %v431, %v386
      %v434 = vsel %vm283, %v432, %v388
      %v435 = vsel %vm286, %v433, %v392
      %v436 = vsel %vm286, %v434, %v394
      %v437 = vsel %vm289, %v435, %v398
      %v438 = vsel %vm289, %v436, %v400
      %v439 = vsel %vm292, %v437, %v406
      %v440 = vsel %vm292, %v438, %v408
      %v441 = vsel %vm295, %v439, %v415
      %v442 = vsel %vm295, %v440, %v417
      %v443 = vsel %vm298, %v441, %v424
      %v444 = vsel %vm298, %v442, %v426
      %445 = vrot.lane.b32.xlu0 %v341, 4
      %v446 = vpop.permute.xlu0 %445
      %447 = vrot.lane.b32.xlu0 %v340, 4
      %v448 = vpop.permute.xlu0 %447
      %451 = vrot.lane.b32.xlu0 %v350, 8
      %v452 = vpop.permute.xlu0 %451
      %453 = vrot.lane.b32.xlu0 %v349, 8
      %v454 = vpop.permute.xlu0 %453
      %457 = vrot.lane.b32.xlu0 %v179, 12
      %v458 = vpop.permute.xlu0 %457
      %459 = vrot.lane.b32.xlu0 %v180, 12
      %v460 = vpop.permute.xlu0 %459
      %463 = vrot.lane.b32.xlu0 %v413, 16
      %v464 = vpop.permute.xlu0 %463
      %465 = vrot.lane.b32.xlu0 %v412, 16
      %v466 = vpop.permute.xlu0 %465
      %469 = vrot.lane.b32.xlu0 %v422, 20
      %v470 = vpop.permute.xlu0 %469
      %471 = vrot.lane.b32.xlu0 %v421, 20
      %v472 = vpop.permute.xlu0 %471
      %477 = vrot.lane.b32.xlu0 %v181, 24
      %v478 = vpop.permute.xlu0 %477
      %479 = vrot.lane.b32.xlu0 %v182, 24
      %v480 = vpop.permute.xlu0 %479
      %v483 = vrot.slane %v181, 1
      %v484 = vrot.slane %v182, 1
      %v485 = vsel %vm205, %v483, %v484
      %486 = vrot.lane.b32.xlu0 %v485, 28
      %v487 = vpop.permute.xlu0 %486
      %488 = vrot.lane.b32.xlu0 %v484, 28
      %v489 = vpop.permute.xlu0 %488
      %v492 = vrot.slane %v181, 2
      %v493 = vrot.slane %v182, 2
      %v494 = vsel %vm215, %v492, %v493
      %495 = vrot.lane.b32.xlu0 %v494, 32
      %v496 = vpop.permute.xlu0 %495
      %497 = vrot.lane.b32.xlu0 %v493, 32
      %v498 = vpop.permute.xlu0 %497
      %v501 = vsel %vm277, %v177, %v446
      %v502 = vsel %vm277, %v178, %v448
      %v503 = vsel %vm280, %v501, %v452
      %v504 = vsel %vm280, %v502, %v454
      %v505 = vsel %vm283, %v503, %v458
      %v506 = vsel %vm283, %v504, %v460
      %v507 = vsel %vm286, %v505, %v464
      %v508 = vsel %vm286, %v506, %v466
      %v509 = vsel %vm289, %v507, %v470
      %v510 = vsel %vm289, %v508, %v472
      %v511 = vsel %vm292, %v509, %v478
      %v512 = vsel %vm292, %v510, %v480
      %v513 = vsel %vm295, %v511, %v487
      %v514 = vsel %vm295, %v512, %v489
      %v515 = vsel %vm298, %v513, %v496
      %v516 = vsel %vm298, %v514, %v498
      %517 = vrot.lane.b32.xlu0 %v413, 4
      %v518 = vpop.permute.xlu0 %517
      %519 = vrot.lane.b32.xlu0 %v412, 4
      %v520 = vpop.permute.xlu0 %519
      %523 = vrot.lane.b32.xlu0 %v422, 8
      %v524 = vpop.permute.xlu0 %523
      %525 = vrot.lane.b32.xlu0 %v421, 8
      %v526 = vpop.permute.xlu0 %525
      %529 = vrot.lane.b32.xlu0 %v181, 12
      %v530 = vpop.permute.xlu0 %529
      %531 = vrot.lane.b32.xlu0 %v182, 12
      %v532 = vpop.permute.xlu0 %531
      %535 = vrot.lane.b32.xlu0 %v485, 16
      %v536 = vpop.permute.xlu0 %535
      %537 = vrot.lane.b32.xlu0 %v484, 16
      %v538 = vpop.permute.xlu0 %537
      %541 = vrot.lane.b32.xlu0 %v494, 20
      %v542 = vpop.permute.xlu0 %541
      %543 = vrot.lane.b32.xlu0 %v493, 20
      %v544 = vpop.permute.xlu0 %543
      %549 = vrot.lane.b32.xlu0 %v183, 24
      %v550 = vpop.permute.xlu0 %549
      %551 = vrot.lane.b32.xlu0 %v184, 24
      %v552 = vpop.permute.xlu0 %551
      %v555 = vrot.slane %v183, 1
      %v556 = vrot.slane %v184, 1
      %v557 = vsel %vm205, %v555, %v556
      %558 = vrot.lane.b32.xlu0 %v557, 28
      %v559 = vpop.permute.xlu0 %558
      %560 = vrot.lane.b32.xlu0 %v556, 28
      %v561 = vpop.permute.xlu0 %560
      %v564 = vrot.slane %v183, 2
      %v565 = vrot.slane %v184, 2
      %v566 = vsel %vm215, %v564, %v565
      %567 = vrot.lane.b32.xlu0 %v566, 32
      %v568 = vpop.permute.xlu0 %567
      %569 = vrot.lane.b32.xlu0 %v565, 32
      %v570 = vpop.permute.xlu0 %569
      %v573 = vsel %vm277, %v179, %v518
      %v574 = vsel %vm277, %v180, %v520
      %v575 = vsel %vm280, %v573, %v524
      %v576 = vsel %vm280, %v574, %v526
      %v577 = vsel %vm283, %v575, %v530
      %v578 = vsel %vm283, %v576, %v532
      %v579 = vsel %vm286, %v577, %v536
      %v580 = vsel %vm286, %v578, %v538
      %v581 = vsel %vm289, %v579, %v542
      %v582 = vsel %vm289, %v580, %v544
      %v583 = vsel %vm292, %v581, %v550
      %v584 = vsel %vm292, %v582, %v552
      %v585 = vsel %vm295, %v583, %v559
      %v586 = vsel %vm295, %v584, %v561
      %v587 = vsel %vm298, %v585, %v568
      %v588 = vsel %vm298, %v586, %v570
      %589 = vrot.lane.b32.xlu0 %v485, 4
      %v590 = vpop.permute.xlu0 %589
      %591 = vrot.lane.b32.xlu0 %v484, 4
      %v592 = vpop.permute.xlu0 %591
      %595 = vrot.lane.b32.xlu0 %v494, 8
      %v596 = vpop.permute.xlu0 %595
      %597 = vrot.lane.b32.xlu0 %v493, 8
      %v598 = vpop.permute.xlu0 %597
      %601 = vrot.lane.b32.xlu0 %v183, 12
      %v602 = vpop.permute.xlu0 %601
      %603 = vrot.lane.b32.xlu0 %v184, 12
      %v604 = vpop.permute.xlu0 %603
      %607 = vrot.lane.b32.xlu0 %v557, 16
      %v608 = vpop.permute.xlu0 %607
      %609 = vrot.lane.b32.xlu0 %v556, 16
      %v610 = vpop.permute.xlu0 %609
      %613 = vrot.lane.b32.xlu0 %v566, 20
      %v614 = vpop.permute.xlu0 %613
      %615 = vrot.lane.b32.xlu0 %v565, 20
      %v616 = vpop.permute.xlu0 %615
      %621 = vrot.lane.b32.xlu0 %v185, 24
      %v622 = vpop.permute.xlu0 %621
      %623 = vrot.lane.b32.xlu0 %v186, 24
      %v624 = vpop.permute.xlu0 %623
      %v627 = vrot.slane %v185, 1
      %v628 = vrot.slane %v186, 1
      %v629 = vsel %vm205, %v627, %v628
      %630 = vrot.lane.b32.xlu0 %v629, 28
      %v631 = vpop.permute.xlu0 %630
      %632 = vrot.lane.b32.xlu0 %v628, 28
      %v633 = vpop.permute.xlu0 %632
      %v636 = vrot.slane %v185, 2
      %v637 = vrot.slane %v186, 2
      %v638 = vsel %vm215, %v636, %v637
      %639 = vrot.lane.b32.xlu0 %v638, 32
      %v640 = vpop.permute.xlu0 %639
      %641 = vrot.lane.b32.xlu0 %v637, 32
      %v642 = vpop.permute.xlu0 %641
      %v645 = vsel %vm277, %v181, %v590
      %v646 = vsel %vm277, %v182, %v592
      %v647 = vsel %vm280, %v645, %v596
      %v648 = vsel %vm280, %v646, %v598
      %v649 = vsel %vm283, %v647, %v602
      %v650 = vsel %vm283, %v648, %v604
      %v651 = vsel %vm286, %v649, %v608
      %v652 = vsel %vm286, %v650, %v610
      %v653 = vsel %vm289, %v651, %v614
      %v654 = vsel %vm289, %v652, %v616
      %v655 = vsel %vm292, %v653, %v622
      %v656 = vsel %vm292, %v654, %v624
      %v657 = vsel %vm295, %v655, %v631
      %v658 = vsel %vm295, %v656, %v633
      %v659 = vsel %vm298, %v657, %v640
      %v660 = vsel %vm298, %v658, %v642
      %661 = vrot.lane.b32.xlu0 %v557, 4
      %v662 = vpop.permute.xlu0 %661
      %663 = vrot.lane.b32.xlu0 %v556, 4
      %v664 = vpop.permute.xlu0 %663
      %667 = vrot.lane.b32.xlu0 %v566, 8
      %v668 = vpop.permute.xlu0 %667
      %669 = vrot.lane.b32.xlu0 %v565, 8
      %v670 = vpop.permute.xlu0 %669
      %673 = vrot.lane.b32.xlu0 %v185, 12
      %v674 = vpop.permute.xlu0 %673
      %675 = vrot.lane.b32.xlu0 %v186, 12
      %v676 = vpop.permute.xlu0 %675
      %679 = vrot.lane.b32.xlu0 %v629, 16
      %v680 = vpop.permute.xlu0 %679
      %681 = vrot.lane.b32.xlu0 %v628, 16
      %v682 = vpop.permute.xlu0 %681
      %685 = vrot.lane.b32.xlu0 %v638, 20
      %v686 = vpop.permute.xlu0 %685
      %687 = vrot.lane.b32.xlu0 %v637, 20
      %v688 = vpop.permute.xlu0 %687
      %693 = vrot.lane.b32.xlu0 %v187, 24
      %v694 = vpop.permute.xlu0 %693
      %695 = vrot.lane.b32.xlu0 %v188, 24
      %v696 = vpop.permute.xlu0 %695
      %v699 = vrot.slane %v187, 1
      %v700 = vrot.slane %v188, 1
      %v701 = vsel %vm205, %v699, %v700
      %702 = vrot.lane.b32.xlu0 %v701, 28
      %v703 = vpop.permute.xlu0 %702
      %704 = vrot.lane.b32.xlu0 %v700, 28
      %v705 = vpop.permute.xlu0 %704
      %v708 = vrot.slane %v187, 2
      %v709 = vrot.slane %v188, 2
      %v710 = vsel %vm215, %v708, %v709
      %711 = vrot.lane.b32.xlu0 %v710, 32
      %v712 = vpop.permute.xlu0 %711
      %713 = vrot.lane.b32.xlu0 %v709, 32
      %v714 = vpop.permute.xlu0 %713
      %v717 = vsel %vm277, %v183, %v662
      %v718 = vsel %vm277, %v184, %v664
      %v719 = vsel %vm280, %v717, %v668
      %v720 = vsel %vm280, %v718, %v670
      %v721 = vsel %vm283, %v719, %v674
      %v722 = vsel %vm283, %v720, %v676
      %v723 = vsel %vm286, %v721, %v680
      %v724 = vsel %vm286, %v722, %v682
      %v725 = vsel %vm289, %v723, %v686
      %v726 = vsel %vm289, %v724, %v688
      %v727 = vsel %vm292, %v725, %v694
      %v728 = vsel %vm292, %v726, %v696
      %v729 = vsel %vm295, %v727, %v703
      %v730 = vsel %vm295, %v728, %v705
      %v731 = vsel %vm298, %v729, %v712
      %v732 = vsel %vm298, %v730, %v714
      %733 = vrot.lane.b32.xlu0 %v629, 4
      %v734 = vpop.permute.xlu0 %733
      %735 = vrot.lane.b32.xlu0 %v628, 4
      %v736 = vpop.permute.xlu0 %735
      %739 = vrot.lane.b32.xlu0 %v638, 8
      %v740 = vpop.permute.xlu0 %739
      %741 = vrot.lane.b32.xlu0 %v637, 8
      %v742 = vpop.permute.xlu0 %741
      %745 = vrot.lane.b32.xlu0 %v187, 12
      %v746 = vpop.permute.xlu0 %745
      %747 = vrot.lane.b32.xlu0 %v188, 12
      %v748 = vpop.permute.xlu0 %747
      %751 = vrot.lane.b32.xlu0 %v701, 16
      %v752 = vpop.permute.xlu0 %751
      %753 = vrot.lane.b32.xlu0 %v700, 16
      %v754 = vpop.permute.xlu0 %753
      %757 = vrot.lane.b32.xlu0 %v710, 20
      %v758 = vpop.permute.xlu0 %757
      %759 = vrot.lane.b32.xlu0 %v709, 20
      %v760 = vpop.permute.xlu0 %759
      %765 = vrot.lane.b32.xlu0 %v189, 24
      %v766 = vpop.permute.xlu0 %765
      %767 = vrot.lane.b32.xlu0 %v190, 24
      %v768 = vpop.permute.xlu0 %767
      %v771 = vrot.slane %v189, 1
      %v772 = vrot.slane %v190, 1
      %v773 = vsel %vm205, %v771, %v772
      %774 = vrot.lane.b32.xlu0 %v773, 28
      %v775 = vpop.permute.xlu0 %774
      %776 = vrot.lane.b32.xlu0 %v772, 28
      %v777 = vpop.permute.xlu0 %776
      %v780 = vrot.slane %v189, 2
      %v781 = vrot.slane %v190, 2
      %v782 = vsel %vm215, %v780, %v781
      %783 = vrot.lane.b32.xlu0 %v782, 32
      %v784 = vpop.permute.xlu0 %783
      %785 = vrot.lane.b32.xlu0 %v781, 32
      %v786 = vpop.permute.xlu0 %785
      %v789 = vsel %vm277, %v185, %v734
      %v790 = vsel %vm277, %v186, %v736
      %v791 = vsel %vm280, %v789, %v740
      %v792 = vsel %vm280, %v790, %v742
      %v793 = vsel %vm283, %v791, %v746
      %v794 = vsel %vm283, %v792, %v748
      %v795 = vsel %vm286, %v793, %v752
      %v796 = vsel %vm286, %v794, %v754
      %v797 = vsel %vm289, %v795, %v758
      %v798 = vsel %vm289, %v796, %v760
      %v799 = vsel %vm292, %v797, %v766
      %v800 = vsel %vm292, %v798, %v768
      %v801 = vsel %vm295, %v799, %v775
      %v802 = vsel %vm295, %v800, %v777
      %v803 = vsel %vm298, %v801, %v784
      %v804 = vsel %vm298, %v802, %v786
      %805 = vrot.lane.b32.xlu0 %v701, 4
      %v806 = vpop.permute.xlu0 %805
      %807 = vrot.lane.b32.xlu0 %v700, 4
      %v808 = vpop.permute.xlu0 %807
      %811 = vrot.lane.b32.xlu0 %v710, 8
      %v812 = vpop.permute.xlu0 %811
      %813 = vrot.lane.b32.xlu0 %v709, 8
      %v814 = vpop.permute.xlu0 %813
      %817 = vrot.lane.b32.xlu0 %v189, 12
      %v818 = vpop.permute.xlu0 %817
      %819 = vrot.lane.b32.xlu0 %v190, 12
      %v820 = vpop.permute.xlu0 %819
      %823 = vrot.lane.b32.xlu0 %v773, 16
      %v824 = vpop.permute.xlu0 %823
      %825 = vrot.lane.b32.xlu0 %v772, 16
      %v826 = vpop.permute.xlu0 %825
      %829 = vrot.lane.b32.xlu0 %v782, 20
      %v830 = vpop.permute.xlu0 %829
      %831 = vrot.lane.b32.xlu0 %v781, 20
      %v832 = vpop.permute.xlu0 %831
      %837 = vrot.lane.b32.xlu0 %v191, 24
      %v838 = vpop.permute.xlu0 %837
      %839 = vrot.lane.b32.xlu0 %v192, 24
      %v840 = vpop.permute.xlu0 %839
      %v843 = vrot.slane %v191, 1
      %v844 = vrot.slane %v192, 1
      %v845 = vsel %vm205, %v843, %v844
      %846 = vrot.lane.b32.xlu0 %v845, 28
      %v847 = vpop.permute.xlu0 %846
      %848 = vrot.lane.b32.xlu0 %v844, 28
      %v849 = vpop.permute.xlu0 %848
      %v852 = vrot.slane %v191, 2
      %v853 = vrot.slane %v192, 2
      %v854 = vsel %vm215, %v852, %v853
      %855 = vrot.lane.b32.xlu0 %v854, 32
      %v856 = vpop.permute.xlu0 %855
      %857 = vrot.lane.b32.xlu0 %v853, 32
      %v858 = vpop.permute.xlu0 %857
      %v861 = vsel %vm277, %v187, %v806
      %v862 = vsel %vm277, %v188, %v808
      %v863 = vsel %vm280, %v861, %v812
      %v864 = vsel %vm280, %v862, %v814
      %v865 = vsel %vm283, %v863, %v818
      %v866 = vsel %vm283, %v864, %v820
      %v867 = vsel %vm286, %v865, %v824
      %v868 = vsel %vm286, %v866, %v826
      %v869 = vsel %vm289, %v867, %v830
      %v870 = vsel %vm289, %v868, %v832
      %v871 = vsel %vm292, %v869, %v838
      %v872 = vsel %vm292, %v870, %v840
      %v873 = vsel %vm295, %v871, %v847
      %v874 = vsel %vm295, %v872, %v849
      %v875 = vsel %vm298, %v873, %v856
      %v876 = vsel %vm298, %v874, %v858
      %877 = vrot.lane.b32.xlu0 %v773, 4
      %v878 = vpop.permute.xlu0 %877
      %879 = vrot.lane.b32.xlu0 %v772, 4
      %v880 = vpop.permute.xlu0 %879
      %883 = vrot.lane.b32.xlu0 %v782, 8
      %v884 = vpop.permute.xlu0 %883
      %885 = vrot.lane.b32.xlu0 %v781, 8
      %v886 = vpop.permute.xlu0 %885
      %889 = vrot.lane.b32.xlu0 %v191, 12
      %v890 = vpop.permute.xlu0 %889
      %891 = vrot.lane.b32.xlu0 %v192, 12
      %v892 = vpop.permute.xlu0 %891
      %895 = vrot.lane.b32.xlu0 %v845, 16
      %v896 = vpop.permute.xlu0 %895
      %897 = vrot.lane.b32.xlu0 %v844, 16
      %v898 = vpop.permute.xlu0 %897
      %901 = vrot.lane.b32.xlu0 %v854, 20
      %v902 = vpop.permute.xlu0 %901
      %903 = vrot.lane.b32.xlu0 %v853, 20
      %v904 = vpop.permute.xlu0 %903
      %909 = vrot.lane.b32.xlu0 %v193, 24
      %v910 = vpop.permute.xlu0 %909
      %911 = vrot.lane.b32.xlu0 %v194, 24
      %v912 = vpop.permute.xlu0 %911
      %v915 = vrot.slane %v193, 1
      %v916 = vrot.slane %v194, 1
      %v917 = vsel %vm205, %v915, %v916
      %918 = vrot.lane.b32.xlu0 %v917, 28
      %v919 = vpop.permute.xlu0 %918
      %920 = vrot.lane.b32.xlu0 %v916, 28
      %v921 = vpop.permute.xlu0 %920
      %v924 = vrot.slane %v193, 2
      %v925 = vrot.slane %v194, 2
      %v926 = vsel %vm215, %v924, %v925
      %927 = vrot.lane.b32.xlu0 %v926, 32
      %v928 = vpop.permute.xlu0 %927
      %929 = vrot.lane.b32.xlu0 %v925, 32
      %v930 = vpop.permute.xlu0 %929
      %v933 = vsel %vm277, %v189, %v878
      %v934 = vsel %vm277, %v190, %v880
      %v935 = vsel %vm280, %v933, %v884
      %v936 = vsel %vm280, %v934, %v886
      %v937 = vsel %vm283, %v935, %v890
      %v938 = vsel %vm283, %v936, %v892
      %v939 = vsel %vm286, %v937, %v896
      %v940 = vsel %vm286, %v938, %v898
      %v941 = vsel %vm289, %v939, %v902
      %v942 = vsel %vm289, %v940, %v904
      %v943 = vsel %vm292, %v941, %v910
      %v944 = vsel %vm292, %v942, %v912
      %v945 = vsel %vm295, %v943, %v919
      %v946 = vsel %vm295, %v944, %v921
      %v947 = vsel %vm298, %v945, %v928
      %v948 = vsel %vm298, %v946, %v930
      %949 = vrot.lane.b32.xlu0 %v845, 4
      %v950 = vpop.permute.xlu0 %949
      %951 = vrot.lane.b32.xlu0 %v844, 4
      %v952 = vpop.permute.xlu0 %951
      %955 = vrot.lane.b32.xlu0 %v854, 8
      %v956 = vpop.permute.xlu0 %955
      %957 = vrot.lane.b32.xlu0 %v853, 8
      %v958 = vpop.permute.xlu0 %957
      %961 = vrot.lane.b32.xlu0 %v193, 12
      %v962 = vpop.permute.xlu0 %961
      %963 = vrot.lane.b32.xlu0 %v194, 12
      %v964 = vpop.permute.xlu0 %963
      %967 = vrot.lane.b32.xlu0 %v917, 16
      %v968 = vpop.permute.xlu0 %967
      %969 = vrot.lane.b32.xlu0 %v916, 16
      %v970 = vpop.permute.xlu0 %969
      %973 = vrot.lane.b32.xlu0 %v926, 20
      %v974 = vpop.permute.xlu0 %973
      %975 = vrot.lane.b32.xlu0 %v925, 20
      %v976 = vpop.permute.xlu0 %975
      %981 = vrot.lane.b32.xlu0 %v195, 24
      %v982 = vpop.permute.xlu0 %981
      %983 = vrot.lane.b32.xlu0 %v196, 24
      %v984 = vpop.permute.xlu0 %983
      %v987 = vrot.slane %v195, 1
      %v988 = vrot.slane %v196, 1
      %v989 = vsel %vm205, %v987, %v988
      %990 = vrot.lane.b32.xlu0 %v989, 28
      %v991 = vpop.permute.xlu0 %990
      %992 = vrot.lane.b32.xlu0 %v988, 28
      %v993 = vpop.permute.xlu0 %992
      %v996 = vrot.slane %v195, 2
      %v997 = vrot.slane %v196, 2
      %v998 = vsel %vm215, %v996, %v997
      %999 = vrot.lane.b32.xlu0 %v998, 32
      %v1000 = vpop.permute.xlu0 %999
      %1001 = vrot.lane.b32.xlu0 %v997, 32
      %v1002 = vpop.permute.xlu0 %1001
      %v1005 = vsel %vm277, %v191, %v950
      %v1006 = vsel %vm277, %v192, %v952
      %v1007 = vsel %vm280, %v1005, %v956
      %v1008 = vsel %vm280, %v1006, %v958
      %v1009 = vsel %vm283, %v1007, %v962
      %v1010 = vsel %vm283, %v1008, %v964
      %v1011 = vsel %vm286, %v1009, %v968
      %v1012 = vsel %vm286, %v1010, %v970
      %v1013 = vsel %vm289, %v1011, %v974
      %v1014 = vsel %vm289, %v1012, %v976
      %v1015 = vsel %vm292, %v1013, %v982
      %v1016 = vsel %vm292, %v1014, %v984
      %v1017 = vsel %vm295, %v1015, %v991
      %v1018 = vsel %vm295, %v1016, %v993
      %v1019 = vsel %vm298, %v1017, %v1000
      %v1020 = vsel %vm298, %v1018, %v1002
      %1021 = vrot.lane.b32.xlu0 %v917, 4
      %v1022 = vpop.permute.xlu0 %1021
      %1023 = vrot.lane.b32.xlu0 %v916, 4
      %v1024 = vpop.permute.xlu0 %1023
      %1027 = vrot.lane.b32.xlu0 %v926, 8
      %v1028 = vpop.permute.xlu0 %1027
      %1029 = vrot.lane.b32.xlu0 %v925, 8
      %v1030 = vpop.permute.xlu0 %1029
      %1033 = vrot.lane.b32.xlu0 %v195, 12
      %v1034 = vpop.permute.xlu0 %1033
      %1035 = vrot.lane.b32.xlu0 %v196, 12
      %v1036 = vpop.permute.xlu0 %1035
      %1039 = vrot.lane.b32.xlu0 %v989, 16
      %v1040 = vpop.permute.xlu0 %1039
      %1041 = vrot.lane.b32.xlu0 %v988, 16
      %v1042 = vpop.permute.xlu0 %1041
      %1045 = vrot.lane.b32.xlu0 %v998, 20
      %v1046 = vpop.permute.xlu0 %1045
      %1047 = vrot.lane.b32.xlu0 %v997, 20
      %v1048 = vpop.permute.xlu0 %1047
      %1053 = vrot.lane.b32.xlu0 %v197, 24
      %v1054 = vpop.permute.xlu0 %1053
      %1055 = vrot.lane.b32.xlu0 %v198, 24
      %v1056 = vpop.permute.xlu0 %1055
      %v1059 = vrot.slane %v197, 1
      %v1060 = vrot.slane %v198, 1
      %v1061 = vsel %vm205, %v1059, %v1060
      %1062 = vrot.lane.b32.xlu0 %v1061, 28
      %v1063 = vpop.permute.xlu0 %1062
      %1064 = vrot.lane.b32.xlu0 %v1060, 28
      %v1065 = vpop.permute.xlu0 %1064
      %v1068 = vrot.slane %v197, 2
      %v1069 = vrot.slane %v198, 2
      %v1070 = vsel %vm215, %v1068, %v1069
      %1071 = vrot.lane.b32.xlu0 %v1070, 32
      %v1072 = vpop.permute.xlu0 %1071
      %1073 = vrot.lane.b32.xlu0 %v1069, 32
      %v1074 = vpop.permute.xlu0 %1073
      %v1077 = vsel %vm277, %v193, %v1022
      %v1078 = vsel %vm277, %v194, %v1024
      %v1079 = vsel %vm280, %v1077, %v1028
      %v1080 = vsel %vm280, %v1078, %v1030
      %v1081 = vsel %vm283, %v1079, %v1034
      %v1082 = vsel %vm283, %v1080, %v1036
      %v1083 = vsel %vm286, %v1081, %v1040
      %v1084 = vsel %vm286, %v1082, %v1042
      %v1085 = vsel %vm289, %v1083, %v1046
      %v1086 = vsel %vm289, %v1084, %v1048
      %v1087 = vsel %vm292, %v1085, %v1054
      %v1088 = vsel %vm292, %v1086, %v1056
      %v1089 = vsel %vm295, %v1087, %v1063
      %v1090 = vsel %vm295, %v1088, %v1065
      %v1091 = vsel %vm298, %v1089, %v1072
      %v1092 = vsel %vm298, %v1090, %v1074
      %1093 = vrot.lane.b32.xlu0 %v989, 4
      %v1094 = vpop.permute.xlu0 %1093
      %1095 = vrot.lane.b32.xlu0 %v988, 4
      %v1096 = vpop.permute.xlu0 %1095
      %1099 = vrot.lane.b32.xlu0 %v998, 8
      %v1100 = vpop.permute.xlu0 %1099
      %1101 = vrot.lane.b32.xlu0 %v997, 8
      %v1102 = vpop.permute.xlu0 %1101
      %1105 = vrot.lane.b32.xlu0 %v197, 12
      %v1106 = vpop.permute.xlu0 %1105
      %1107 = vrot.lane.b32.xlu0 %v198, 12
      %v1108 = vpop.permute.xlu0 %1107
      %1111 = vrot.lane.b32.xlu0 %v1061, 16
      %v1112 = vpop.permute.xlu0 %1111
      %1113 = vrot.lane.b32.xlu0 %v1060, 16
      %v1114 = vpop.permute.xlu0 %1113
      %1117 = vrot.lane.b32.xlu0 %v1070, 20
      %v1118 = vpop.permute.xlu0 %1117
      %1119 = vrot.lane.b32.xlu0 %v1069, 20
      %v1120 = vpop.permute.xlu0 %1119
      %1125 = vrot.lane.b32.xlu0 %v199, 24
      %v1126 = vpop.permute.xlu0 %1125
      %1127 = vrot.lane.b32.xlu0 %v200, 24
      %v1128 = vpop.permute.xlu0 %1127
      %v1131 = vrot.slane %v199, 1
      %v1132 = vrot.slane %v200, 1
      %v1133 = vsel %vm205, %v1131, %v1132
      %1134 = vrot.lane.b32.xlu0 %v1133, 28
      %v1135 = vpop.permute.xlu0 %1134
      %1136 = vrot.lane.b32.xlu0 %v1132, 28
      %v1137 = vpop.permute.xlu0 %1136
      %v1140 = vrot.slane %v199, 2
      %v1141 = vrot.slane %v200, 2
      %v1142 = vsel %vm215, %v1140, %v1141
      %1143 = vrot.lane.b32.xlu0 %v1142, 32
      %v1144 = vpop.permute.xlu0 %1143
      %1145 = vrot.lane.b32.xlu0 %v1141, 32
      %v1146 = vpop.permute.xlu0 %1145
      %v1149 = vsel %vm277, %v195, %v1094
      %v1150 = vsel %vm277, %v196, %v1096
      %v1151 = vsel %vm280, %v1149, %v1100
      %v1152 = vsel %vm280, %v1150, %v1102
      %v1153 = vsel %vm283, %v1151, %v1106
      %v1154 = vsel %vm283, %v1152, %v1108
      %v1155 = vsel %vm286, %v1153, %v1112
      %v1156 = vsel %vm286, %v1154, %v1114
      %v1157 = vsel %vm289, %v1155, %v1118
      %v1158 = vsel %vm289, %v1156, %v1120
      %v1159 = vsel %vm292, %v1157, %v1126
      %v1160 = vsel %vm292, %v1158, %v1128
      %v1161 = vsel %vm295, %v1159, %v1135
      %v1162 = vsel %vm295, %v1160, %v1137
      %v1163 = vsel %vm298, %v1161, %v1144
      %v1164 = vsel %vm298, %v1162, %v1146
      %1165 = vrot.lane.b32.xlu0 %v1061, 4
      %v1166 = vpop.permute.xlu0 %1165
      %1167 = vrot.lane.b32.xlu0 %v1060, 4
      %v1168 = vpop.permute.xlu0 %1167
      %1171 = vrot.lane.b32.xlu0 %v1070, 8
      %v1172 = vpop.permute.xlu0 %1171
      %1173 = vrot.lane.b32.xlu0 %v1069, 8
      %v1174 = vpop.permute.xlu0 %1173
      %1177 = vrot.lane.b32.xlu0 %v199, 12
      %v1178 = vpop.permute.xlu0 %1177
      %1179 = vrot.lane.b32.xlu0 %v200, 12
      %v1180 = vpop.permute.xlu0 %1179
      %1183 = vrot.lane.b32.xlu0 %v1133, 16
      %v1184 = vpop.permute.xlu0 %1183
      %1185 = vrot.lane.b32.xlu0 %v1132, 16
      %v1186 = vpop.permute.xlu0 %1185
      %1189 = vrot.lane.b32.xlu0 %v1142, 20
      %v1190 = vpop.permute.xlu0 %1189
      %1191 = vrot.lane.b32.xlu0 %v1141, 20
      %v1192 = vpop.permute.xlu0 %1191
      %1197 = vrot.lane.b32.xlu0 %v201, 24
      %v1198 = vpop.permute.xlu0 %1197
      %1199 = vrot.lane.b32.xlu0 %v202, 24
      %v1200 = vpop.permute.xlu0 %1199
      %v1203 = vrot.slane %v201, 1
      %v1204 = vrot.slane %v202, 1
      %v1205 = vsel %vm205, %v1203, %v1204
      %1206 = vrot.lane.b32.xlu0 %v1205, 28
      %v1207 = vpop.permute.xlu0 %1206
      %1208 = vrot.lane.b32.xlu0 %v1204, 28
      %v1209 = vpop.permute.xlu0 %1208
      %v1212 = vrot.slane %v201, 2
      %v1213 = vrot.slane %v202, 2
      %v1214 = vsel %vm215, %v1212, %v1213
      %1215 = vrot.lane.b32.xlu0 %v1214, 32
      %v1216 = vpop.permute.xlu0 %1215
      %1217 = vrot.lane.b32.xlu0 %v1213, 32
      %v1218 = vpop.permute.xlu0 %1217
      %v1221 = vsel %vm277, %v197, %v1166
      %v1222 = vsel %vm277, %v198, %v1168
      %v1223 = vsel %vm280, %v1221, %v1172
      %v1224 = vsel %vm280, %v1222, %v1174
      %v1225 = vsel %vm283, %v1223, %v1178
      %v1226 = vsel %vm283, %v1224, %v1180
      %v1227 = vsel %vm286, %v1225, %v1184
      %v1228 = vsel %vm286, %v1226, %v1186
      %v1229 = vsel %vm289, %v1227, %v1190
      %v1230 = vsel %vm289, %v1228, %v1192
      %v1231 = vsel %vm292, %v1229, %v1198
      %v1232 = vsel %vm292, %v1230, %v1200
      %v1233 = vsel %vm295, %v1231, %v1207
      %v1234 = vsel %vm295, %v1232, %v1209
      %v1235 = vsel %vm298, %v1233, %v1216
      %v1236 = vsel %vm298, %v1234, %v1218
      %v1239 = vrot.slane %v371, 2
      %v1240 = vrot.slane %v372, 2
      %v1241 = vsel %vm215, %v1239, %v1240
      %vm1246 = vcmask 1043456
      %v1247 = vrot.slane %v443, 4
      %v1248 = vrot.slane %v444, 4
      %v1249 = vsel %vm1246, %v1247, %v1248
      %vm1254 = vcmask 1041408
      %v1255 = vrot.slane %v515, 6
      %v1256 = vrot.slane %v516, 6
      %v1257 = vsel %vm1254, %v1255, %v1256
      %v1261 = vrot.slane %v659, 2
      %v1262 = vrot.slane %v660, 2
      %v1263 = vsel %vm215, %v1261, %v1262
      %v1268 = vrot.slane %v731, 4
      %v1269 = vrot.slane %v732, 4
      %v1270 = vsel %vm1246, %v1268, %v1269
      %v1275 = vrot.slane %v803, 6
      %v1276 = vrot.slane %v804, 6
      %v1277 = vsel %vm1254, %v1275, %v1276
      %v1281 = vrot.slane %v947, 2
      %v1282 = vrot.slane %v948, 2
      %v1283 = vsel %vm215, %v1281, %v1282
      %v1288 = vrot.slane %v1019, 4
      %v1289 = vrot.slane %v1020, 4
      %v1290 = vsel %vm1246, %v1288, %v1289
      %v1295 = vrot.slane %v1091, 6
      %v1296 = vrot.slane %v1092, 6
      %v1297 = vsel %vm1254, %v1295, %v1296
      %v1301 = vrot.slane %v1235, 2
      %v1302 = vrot.slane %v1236, 2
      %v1303 = vsel %vm215, %v1301, %v1302
      %v1305 = vsel %vm215, %v300, %v1239
      %v1306 = vsel %vm1246, %v1240, %v1247
      %v1307 = vsel %vm1254, %v1248, %v1255
      %v1308 = vsel %vm215, %v588, %v1261
      %v1309 = vsel %vm1246, %v1262, %v1268
      %v1310 = vsel %vm1254, %v1269, %v1275
      %v1311 = vsel %vm215, %v876, %v1281
      %v1312 = vsel %vm1246, %v1282, %v1288
      %v1313 = vsel %vm1254, %v1289, %v1295
      %v1314 = vsel %vm215, %v1164, %v1301
      %v1315 = vld [vmem:[%s1] sm:$0xff]
      %v1316 = vld [vmem:[%s1 + $0x8] sm:$0xff]
      %v1317 = vld [vmem:[%s1 + $0x10] sm:$0xff]
      %v1318 = vld [vmem:[%s1 + $0x18] sm:$0xff]
      %v1319 = vld [vmem:[%s1 + $0x20] sm:$0xf]
      %vm1320 = vcmask 293888
      %v1322 = vsel %vm1320, %v299, 0
      %v1325 = vsel %vm1320, %v1305, 0
      %v1327 = vsel %vm1320, %v1241, 0
      %v1330 = vsel %vm1320, %v1306, 0
      %v1332 = vsel %vm1320, %v1249, 0
      %v1335 = vsel %vm1320, %v1307, 0
      %v1337 = vsel %vm1320, %v1257, 0
      %v1340 = vsel %vm1320, %v587, 0
      %v1343 = vsel %vm1320, %v1308, 0
      %v1345 = vsel %vm1320, %v1263, 0
      %v1348 = vsel %vm1320, %v1309, 0
      %v1350 = vsel %vm1320, %v1270, 0
      %v1353 = vsel %vm1320, %v1310, 0
      %v1355 = vsel %vm1320, %v1277, 0
      %v1358 = vsel %vm1320, %v875, 0
      %v1361 = vsel %vm1320, %v1311, 0
      %v1363 = vsel %vm1320, %v1283, 0
      %v1366 = vsel %vm1320, %v1312, 0
      %v1368 = vsel %vm1320, %v1290, 0
      %v1371 = vsel %vm1320, %v1313, 0
      %v1373 = vsel %vm1320, %v1297, 0
      %v1376 = vsel %vm1320, %v1163, 0
      %v1379 = vsel %vm1320, %v1314, 0
      %v1381 = vsel %vm1320, %v1303, 0
      %v1383 = vsel %vm1320, %v1302, 0
      %v1386 = vsel %vm1246, %v1319, 0
      %1388 = vmatprep.subr.mxu0 0.0
      %1389 = vmatpush1.msra.mxu0 %v1315
      %1390 = vmatprep.subr.mxu0 0.0
      %1391 = vmatpush1.msra.mxu0 %v1316
      %1392 = vmatprep.subr.mxu0 0.0
      %1393 = vmatpush1.msra.mxu0 %v1317
      %1394 = vmatprep.subr.mxu0 0.0
      %1395 = vmatpush1.msra.mxu0 %v1318
      %1396 = vmatprep.subr.mxu0 0.0
      %1397 = vmatpush1.msra.mxu0 %v1386
      %1398 = vmatprep.subr.mxu0 0.0
      %1399 = vmatpush1.msra.mxu0 0.0
      %1400 = vmatprep.subr.mxu0 0.0
      %1401 = vmatpush1.msra.mxu0 0.0
      %1402 = vmatprep.subr.mxu0 0.0
      %1403 = vmatpush1.msra.mxu0 0.0
      %1404 = vmatprep.subr.mxu0 0.0
      %1405 = vmatpush1.msra.mxu0 0.0
      %1406 = vmatprep.subr.mxu0 0.0
      %1407 = vmatpush1.msra.mxu0 0.0
      %1408 = vmatprep.subr.mxu0 0.0
      %1409 = vmatpush1.msra.mxu0 0.0
      %1410 = vmatprep.subr.mxu0 0.0
      %1411 = vmatpush1.msra.mxu0 0.0
      %1412 = vmatprep.subr.mxu0 0.0
      %1413 = vmatpush1.msra.mxu0 0.0
      %1414 = vmatprep.subr.mxu0 0.0
      %1415 = vmatpush1.msra.mxu0 0.0
      %1416 = vmatprep.subr.mxu0 0.0
      %1417 = vmatpush1.msra.mxu0 0.0
      %1418 = vmatprep.subr.mxu0 0.0
      %1419 = vmatpush1.msra.mxu0 0.0
      %1420 = vmatprep.subr.mxu0 0.0
      %1421 = vmatpush1.msra.mxu0 0.0
      %1422 = vmatprep.subr.mxu0 0.0
      %1423 = vmatpush1.msra.mxu0 0.0
      %1424 = vmatprep.subr.mxu0 0.0
      %1425 = vmatpush1.msra.mxu0 0.0
      %1426 = vmatprep.subr.mxu0 0.0
      %1427 = vmatpush1.msra.mxu0 0.0
      %1428 = vmatprep.subr.mxu0 0.0
      %1429 = vmatpush1.msra.mxu0 0.0
      %1430 = vmatprep.subr.mxu0 0.0
      %1431 = vmatpush1.msra.mxu0 0.0
      %1432 = vmatprep.subr.mxu0 0.0
      %1433 = vmatpush1.msra.mxu0 0.0
      %1434 = vmatprep.subr.mxu0 0.0
      %1435 = vmatpush1.msra.mxu0 0.0
      %1436 = vmatprep.subr.mxu0 0.0
      %1437 = vmatpush1.msra.mxu0 0.0
      %1438 = vmatprep.subr.mxu0 0.0
      %1439 = vmatpush1.msra.mxu0 0.0
      %1440 = vmatprep.subr.mxu0 0.0
      %1441 = vmatpush1.msra.mxu0 0.0
      %1442 = vmatprep.subr.mxu0 0.0
      %1443 = vmatpush1.msra.mxu0 0.0
      %1444 = vmatprep.subr.mxu0 0.0
      %1445 = vmatpush1.msra.mxu0 0.0
      %1446 = vmatprep.subr.mxu0 0.0
      %1447 = vmatpush1.msra.mxu0 0.0
      %1448 = vmatprep.subr.mxu0 0.0
      %1449 = vmatpush1.msra.mxu0 0.0
      %1450 = vmatprep.subr.mxu0 0.0
      %1451 = vmatpush1.msra.mxu0 0.0
      %1452 = vmatprep.mubr.f32.mxu0 0.0
      %1453 = vmatmul.mubr.f32.gmra.mrb[0].mxu0 %v1322
      %v1454 = vpop.f32.mrb[0].mxu0
      %v1455 = vadd.f32 0.0, %v1454
      %v1456 = vpop.f32.mrb[0].mxu0
      %1457 = vmatprep.mubr.f32.mxu0 0.0
      %1458 = vmatmul.mubr.f32.gmra.mrb[0].mxu0 %v1325
      %v1459 = vpop.f32.mrb[0].mxu0
      %v1460 = vadd.f32 0.0, %v1459
      %v1461 = vpop.f32.mrb[0].mxu0
      %1462 = vmatprep.mubr.f32.mxu0 0.0
      %1463 = vmatmul.mubr.f32.gmra.mrb[0].mxu0 %v1327
      %v1464 = vpop.f32.mrb[0].mxu0
      %v1465 = vadd.f32 0.0, %v1464
      %v1466 = vpop.f32.mrb[0].mxu0
      %1467 = vmatprep.mubr.f32.mxu0 0.0
      %1468 = vmatmul.mubr.f32.gmra.mrb[0].mxu0 %v1330
      %v1469 = vpop.f32.mrb[0].mxu0
      %v1470 = vadd.f32 0.0, %v1469
      %v1471 = vpop.f32.mrb[0].mxu0
      %1472 = vmatprep.mubr.f32.mxu0 0.0
      %1473 = vmatmul.mubr.f32.gmra.mrb[0].mxu0 %v1332
      %v1474 = vpop.f32.mrb[0].mxu0
      %v1475 = vadd.f32 0.0, %v1474
      %v1476 = vpop.f32.mrb[0].mxu0
      %1477 = vmatprep.mubr.f32.mxu0 0.0
      %1478 = vmatmul.mubr.f32.gmra.mrb[0].mxu0 %v1335
      %v1479 = vpop.f32.mrb[0].mxu0
      %v1480 = vadd.f32 0.0, %v1479
      %v1481 = vpop.f32.mrb[0].mxu0
      %1482 = vmatprep.mubr.f32.mxu0 0.0
      %1483 = vmatmul.mubr.f32.gmra.mrb[0].mxu0 %v1337
      %v1484 = vpop.f32.mrb[0].mxu0
      %v1485 = vadd.f32 0.0, %v1484
      %v1486 = vpop.f32.mrb[0].mxu0
      %1487 = vmatprep.mubr.f32.mxu0 0.0
      %1488 = vmatmul.mubr.f32.gmra.mrb[0].mxu0 %v1340
      %v1489 = vpop.f32.mrb[0].mxu0
      %v1490 = vadd.f32 0.0, %v1489
      %v1491 = vpop.f32.mrb[0].mxu0
      %1492 = vmatprep.mubr.f32.mxu0 0.0
      %1493 = vmatmul.mubr.f32.gmra.mrb[0].mxu0 %v1343
      %v1494 = vpop.f32.mrb[0].mxu0
      %v1495 = vadd.f32 0.0, %v1494
      %v1496 = vpop.f32.mrb[0].mxu0
      %1497 = vmatprep.mubr.f32.mxu0 0.0
      %1498 = vmatmul.mubr.f32.gmra.mrb[0].mxu0 %v1345
      %v1499 = vpop.f32.mrb[0].mxu0
      %v1500 = vadd.f32 0.0, %v1499
      %v1501 = vpop.f32.mrb[0].mxu0
      %1502 = vmatprep.mubr.f32.mxu0 0.0
      %1503 = vmatmul.mubr.f32.gmra.mrb[0].mxu0 %v1348
      %v1504 = vpop.f32.mrb[0].mxu0
      %v1505 = vadd.f32 0.0, %v1504
      %v1506 = vpop.f32.mrb[0].mxu0
      %1507 = vmatprep.mubr.f32.mxu0 0.0
      %1508 = vmatmul.mubr.f32.gmra.mrb[0].mxu0 %v1350
      %v1509 = vpop.f32.mrb[0].mxu0
      %v1510 = vadd.f32 0.0, %v1509
      %v1511 = vpop.f32.mrb[0].mxu0
      %1512 = vmatprep.mubr.f32.mxu0 0.0
      %1513 = vmatmul.mubr.f32.gmra.mrb[0].mxu0 %v1353
      %v1514 = vpop.f32.mrb[0].mxu0
      %v1515 = vadd.f32 0.0, %v1514
      %v1516 = vpop.f32.mrb[0].mxu0
      %1517 = vmatprep.mubr.f32.mxu0 0.0
      %1518 = vmatmul.mubr.f32.gmra.mrb[0].mxu0 %v1355
      %v1519 = vpop.f32.mrb[0].mxu0
      %v1520 = vadd.f32 0.0, %v1519
      %v1521 = vpop.f32.mrb[0].mxu0
      %1522 = vmatprep.mubr.f32.mxu0 0.0
      %1523 = vmatmul.mubr.f32.gmra.mrb[0].mxu0 %v1358
      %v1524 = vpop.f32.mrb[0].mxu0
      %v1525 = vadd.f32 0.0, %v1524
      %v1526 = vpop.f32.mrb[0].mxu0
      %1527 = vmatprep.mubr.f32.mxu0 0.0
      %1528 = vmatmul.mubr.f32.gmra.mrb[0].mxu0 %v1361
      %v1529 = vpop.f32.mrb[0].mxu0
      %v1530 = vadd.f32 0.0, %v1529
      %v1531 = vpop.f32.mrb[0].mxu0
      %1532 = vmatprep.mubr.f32.mxu0 0.0
      %1533 = vmatmul.mubr.f32.gmra.mrb[0].mxu0 %v1363
      %v1534 = vpop.f32.mrb[0].mxu0
      %v1535 = vadd.f32 0.0, %v1534
      %v1536 = vpop.f32.mrb[0].mxu0
      %1537 = vmatprep.mubr.f32.mxu0 0.0
      %1538 = vmatmul.mubr.f32.gmra.mrb[0].mxu0 %v1366
      %v1539 = vpop.f32.mrb[0].mxu0
      %v1540 = vadd.f32 0.0, %v1539
      %v1541 = vpop.f32.mrb[0].mxu0
      %1542 = vmatprep.mubr.f32.mxu0 0.0
      %1543 = vmatmul.mubr.f32.gmra.mrb[0].mxu0 %v1368
      %v1544 = vpop.f32.mrb[0].mxu0
      %v1545 = vadd.f32 0.0, %v1544
      %v1546 = vpop.f32.mrb[0].mxu0
      %1547 = vmatprep.mubr.f32.mxu0 0.0
      %1548 = vmatmul.mubr.f32.gmra.mrb[0].mxu0 %v1371
      %v1549 = vpop.f32.mrb[0].mxu0
      %v1550 = vadd.f32 0.0, %v1549
      %v1551 = vpop.f32.mrb[0].mxu0
      %1552 = vmatprep.mubr.f32.mxu0 0.0
      %1553 = vmatmul.mubr.f32.gmra.mrb[0].mxu0 %v1373
      %v1554 = vpop.f32.mrb[0].mxu0
      %v1555 = vadd.f32 0.0, %v1554
      %v1556 = vpop.f32.mrb[0].mxu0
      %1557 = vmatprep.mubr.f32.mxu0 0.0
      %1558 = vmatmul.mubr.f32.gmra.mrb[0].mxu0 %v1376
      %v1559 = vpop.f32.mrb[0].mxu0
      %v1560 = vadd.f32 0.0, %v1559
      %v1561 = vpop.f32.mrb[0].mxu0
      %1562 = vmatprep.mubr.f32.mxu0 0.0
      %1563 = vmatmul.mubr.f32.gmra.mrb[0].mxu0 %v1379
      %v1564 = vpop.f32.mrb[0].mxu0
      %v1565 = vadd.f32 0.0, %v1564
      %v1566 = vpop.f32.mrb[0].mxu0
      %1567 = vmatprep.mubr.f32.mxu0 0.0
      %1568 = vmatmul.mubr.f32.gmra.mrb[0].mxu0 %v1381
      %v1569 = vpop.f32.mrb[0].mxu0
      %v1570 = vadd.f32 0.0, %v1569
      %v1571 = vpop.f32.mrb[0].mxu0
      %1572 = vmatprep.mubr.f32.mxu0 0.0
      %1573 = vmatmul.mubr.f32.gmra.mrb[0].mxu0 %v1383
      %v1574 = vpop.f32.mrb[0].mxu0
      %v1575 = vadd.f32 0.0, %v1574
      %v1576 = vpop.f32.mrb[0].mxu0
      %1577 = vdwg.mxu0
      %1578 = vxpose.xlu0.b32.start [1/16] %v1455, 128
      %1579 = vxpose.xlu0.b32.cont [2/16] %v1460, 128
      %1580 = vxpose.xlu0.b32.cont [3/16] %v1465, 128
      %1581 = vxpose.xlu0.b32.cont [4/16] %v1470, 128
      %1582 = vxpose.xlu0.b32.cont [5/16] %v1475, 128
      %1583 = vxpose.xlu0.b32.cont [6/16] %v1480, 128
      %1584 = vxpose.xlu0.b32.cont [7/16] %v1485, 128
      %1585 = vxpose.xlu0.b32.cont [8/16] %v1490, 128
      %1586 = vxpose.xlu0.b32.cont [9/16] %v1495, 128
      %1587 = vxpose.xlu0.b32.cont [10/16] %v1500, 128
      %1588 = vxpose.xlu0.b32.cont [11/16] %v1505, 128
      %1589 = vxpose.xlu0.b32.cont [12/16] %v1510, 128
      %1590 = vxpose.xlu0.b32.cont [13/16] %v1515, 128
      %1591 = vxpose.xlu0.b32.cont [14/16] %v1520, 128
      %1592 = vxpose.xlu0.b32.cont [15/16] %v1525, 128
      %1593 = vxpose.xlu0.b32.end [16/16] %v1530, 128
      %v1594 = vpop.trf.xlu0
      %v1595 = vpop.trf.xlu0
      %v1596 = vpop.trf.xlu0
      %v1597 = vpop.trf.xlu0
      %v1598 = vpop.trf.xlu0
      %v1599 = vpop.trf.xlu0
      %v1600 = vpop.trf.xlu0
      %v1601 = vpop.trf.xlu0
      %v1602 = vpop.trf.xlu0
      %v1603 = vpop.trf.xlu0
      %v1604 = vpop.trf.xlu0
      %v1605 = vpop.trf.xlu0
      %v1606 = vpop.trf.xlu0
      %v1607 = vpop.trf.xlu0
      %v1608 = vpop.trf.xlu0
      %v1609 = vpop.trf.xlu0
      %1610 = vxpose.xlu0.b32.start [1/16] %v1535, 128
      %1611 = vxpose.xlu0.b32.cont [2/16] %v1540, 128
      %1612 = vxpose.xlu0.b32.cont [3/16] %v1545, 128
      %1613 = vxpose.xlu0.b32.cont [4/16] %v1550, 128
      %1614 = vxpose.xlu0.b32.cont [5/16] %v1555, 128
      %1615 = vxpose.xlu0.b32.cont [6/16] %v1560, 128
      %1616 = vxpose.xlu0.b32.cont [7/16] %v1565, 128
      %1617 = vxpose.xlu0.b32.cont [8/16] %v1570, 128
      %1618 = vxpose.xlu0.b32.cont [9/16] %v1575, 128
      %1619 = vxpose.xlu0.b32.cont [10/16] 0.0, 128
      %1620 = vxpose.xlu0.b32.cont [11/16] 0.0, 128
      %1621 = vxpose.xlu0.b32.cont [12/16] 0.0, 128
      %1622 = vxpose.xlu0.b32.cont [13/16] 0.0, 128
      %1623 = vxpose.xlu0.b32.cont [14/16] 0.0, 128
      %1624 = vxpose.xlu0.b32.cont [15/16] 0.0, 128
      %1625 = vxpose.xlu0.b32.end [16/16] 0.0, 128
      %v1626 = vpop.trf.xlu0
      %v1627 = vpop.trf.xlu0
      %v1628 = vpop.trf.xlu0
      %v1629 = vpop.trf.xlu0
      %v1630 = vpop.trf.xlu0
      %v1631 = vpop.trf.xlu0
      %v1632 = vpop.trf.xlu0
      %v1633 = vpop.trf.xlu0
      %v1634 = vpop.trf.xlu0
      %v1635 = vpop.trf.xlu0
      %v1636 = vpop.trf.xlu0
      %v1637 = vpop.trf.xlu0
      %v1638 = vpop.trf.xlu0
      %v1639 = vpop.trf.xlu0
      %v1640 = vpop.trf.xlu0
      %v1641 = vpop.trf.xlu0
      %v1642 = vld [vmem:[%s2] sm:$0xff]
      %1644 = vset.pattern.permute.xlu0 0
      %1645 = vperm.xlu0 %1644, %v1642
      %v1646 = vpop.permute.xlu0 %1645
      %v1648 = vadd.f32 %v1594, %v1646
      %v1649 = vadd.f32 %v1626, %v1646
      %1650 = vst [vmem:[%s170] sm:$0xff] %v1648
      %vm1651 = vcmask 556032
      %1652 = vst.msk [vmem:[%s170 + $0x8] sm:$0xff] %vm1651, %v1649
      %p1653 = scmp.lt.s32.totalorder %s14, 1
      %s1654 = scalar_select %p1653, %s14, 1
      %s1655 = smul.addr %s1654, 2
      %s1656 = smul.addr %s1655, 8
      %s1657 = scalar_lea.vmem %s3, %s1656
      // Predicated region
      $region33: #{concat_conv2d.1} parent=31 // pred_check
        %p1658 = pneg %p100
      $region34: #{concat_conv2d.1} parent=31 // pred_check_branch
        %1660 = sbr.rel (%p1658) target = $region36
      $region35: #{concat_conv2d.1} parent=31 // pred_region
        _
      $region36: #{concat_conv2d.1} parent=31 // pred_fallthru
        _
    $region32: #{concat_conv2d.1} parent=5 // pred_fallthru
      _
    %p1661 = scmp.le.s32.totalorder 2, %s9
    // Predicated region
    $region37: #{concat_conv2d.1} parent=5 // pred_check
      %p1662 = pneg %p1661
    $region38: #{concat_conv2d.1} parent=5 // pred_check_branch
      %1664 = sbr.rel (%p1662) target = $region40
    $region39: #{concat_conv2d.1} parent=5 // pred_region
      %s1665 = ssub.s32 %s9, 2
      // Predicated region
      $region41: #{concat_conv2d.1} parent=39 // pred_check
        %p1666 = pneg %p106
      $region42: #{concat_conv2d.1} parent=39 // pred_check_branch
        %1668 = sbr.rel (%p1666) target = $region44
      $region43: #{concat_conv2d.1} parent=39 // pred_region
        %p1669 = scmp.lt.s32.totalorder %s15, 1
        %s1670 = scalar_select %p1669, %s15, 1
        %s1671 = smul.addr %s1670, 2
        %s1672 = smul.addr %s1671, 8
        %s1673 = scalar_lea.vmem %s3, %s1672
      $region44: #{concat_conv2d.1} parent=39 // pred_fallthru
        _
    $region40: #{concat_conv2d.1} parent=5 // pred_fallthru
      _
  $region6: #{concat_conv2d.1} parent=0 // loop_footer
    %s13 = sadd.s32 1, %s9
  $region7: #{concat_conv2d.1} parent=0 // loop_footer_branch
    %8 = sbr.rel target = $region3
  $region8: #{concat_conv2d.1} parent=0 // loop_exit
    _

</llo_original>
